<compile_context>
chip_gen: v7x
topology: tpu7x:2x2x1
jax: 0.10.0
libtpu: 0.0.40
codegen_flags: <defaults>
</compile_context>

<pallas_src>
import jax
import jax.numpy as jnp
import numpy as np
from jax.experimental import pallas as pl
from jax.experimental.pallas import tpu as pltpu


# -----------------------------------------------------------------------------
# Config (small, deterministic, consistent with the module's __init__)
# -----------------------------------------------------------------------------
NUM_MODELS = 4      # cfg.model.num_models
WINDOW_H   = 4      # cfg.data.num_hist
STATE_DIM  = 16     # cfg.model.state_dim
ACTION_DIM = 8
HIDDEN     = 128
BATCH      = 200    # deliberately NOT a multiple of ROW_TILE to exercise row padding
ROW_TILE   = 128    # rows (MXU sublane dim) per grid step

FEAT_DIM = WINDOW_H * (2 * STATE_DIM + ACTION_DIM)


# -----------------------------------------------------------------------------
# Kernel
# -----------------------------------------------------------------------------
def _make_ensemble_kernel(state_dim):
    D = state_dim

    def kernel(s_ref, m_ref, a_ref,
               w1s_ref, w1m_ref, w1a_ref, b1_ref,
               w2p_ref, b2p_ref, svar_ref, out_ref):
        # Elementwise path stays f32 (v5e has no bf16 VPU); cast only at MXU operands.
        s = s_ref[...]                               # (R, H*D) f32
        mk = m_ref[...].astype(jnp.float32)          # (R, H*D) int8 -> f32
        a = a_ref[...]                               # (R, H*A) f32

        xs = (s * mk).astype(jnp.bfloat16)
        xm = mk.astype(jnp.bfloat16)
        xa = a.astype(jnp.bfloat16)

        # Layer 1: logical (R, F) @ (F, M*Hd) wide matmul, contraction split by feature
        # group so no in-kernel concat/reshape is needed; f32 accumulation on the MXU.
        pre = (jnp.dot(xs, w1s_ref[...], preferred_element_type=jnp.float32)
               + jnp.dot(xm, w1m_ref[...], preferred_element_type=jnp.float32)
               + jnp.dot(xa, w1a_ref[...], preferred_element_type=jnp.float32)
               + b1_ref[...])                        # (R, M*Hd) f32
        h = jnp.maximum(pre, 0.0).astype(jnp.bfloat16)

        # Layer 2: packed weights emit [mean | (pred_m - mean) per model | zeros]
        # directly, so the ensemble mean rides the same MXU pass.
        p = (jnp.dot(h, w2p_ref[...], preferred_element_type=jnp.float32)
             + b2p_ref[...])                         # (R, OUT_LANES) f32

        # Var (unbiased=False): square the residual block (VPU, full width) and reduce
        # over models with a tiny selector matmul (MXU) -> var lands in lanes [D, 2D).
        sq = p * p
        varv = jnp.dot(sq, svar_ref[...], preferred_element_type=jnp.float32)

        # Lane-dense output [mean (D) | var (D) | zeros]: one unmasked full-width store.
        lane = jax.lax.broadcasted_iota(jnp.int32, p.shape, 1)
        out_ref[...] = jnp.where(lane < D, p, varv)

    return kernel


# -----------------------------------------------------------------------------
# Host-side weight packing ("pure layout plumbing", done once per parameter set).
# -----------------------------------------------------------------------------
def pack_ensemble_params(params, H, D, A):
    """Repack (M,F,Hd)/(M,Hd,D) ensemble weights into MXU-friendly resident slabs."""
    w1 = np.asarray(params["w1"], dtype=np.float32)          # (M, F, Hd)
    b1 = np.asarray(params["b1"], dtype=np.float32)          # (M, 1, Hd)
    w2 = np.asarray(params["w2"], dtype=np.float32)          # (M, Hd, D)
    b2 = np.asarray(params["b2"], dtype=np.float32).reshape(-1, D)   # (M, D)

    M, F, Hd = w1.shape
    blk = 2 * D + A
    assert F == H * blk

    w1r = w1.reshape(M, H, blk, Hd)

    def pack_group(group):   # (M, H, g, Hd) -> (H*g, M*Hd): models packed along MXU N
        g = group.shape[2]
        return group.transpose(1, 2, 0, 3).reshape(H * g, M * Hd)

    w1s = pack_group(w1r[:, :, :D, :])          # rows match state_hist.reshape(B, H*D)
    w1m = pack_group(w1r[:, :, D:2 * D, :])     # rows match mask_hist.reshape(B, H*D)
    w1a = pack_group(w1r[:, :, 2 * D:, :])      # rows match action_hist.reshape(B, H*A)

    # Layer-2 packed columns: [ mean | per-model (pred - mean) | zero pad to 128 ].
    out_lanes = ((D + M * D + 127) // 128) * 128
    w2_mean = (w2 / M).reshape(M * Hd, D)       # row-block k = W2[k] / M
    w2p = np.zeros((M * Hd, out_lanes), np.float32)
    w2p[:, :D] = w2_mean
    for m in range(M):
        w2p[:, D + m * D:D + (m + 1) * D] = -w2_mean          # -W2[k]/M on every block
        w2p[m * Hd:(m + 1) * Hd, D + m * D:D + (m + 1) * D] += w2[m]   # +W2[m] on own block

    b2_mean = b2.mean(axis=0)
    b2p = np.zeros((1, out_lanes), np.float32)
    b2p[0, :D] = b2_mean
    b2p[0, D:D + M * D] = (b2 - b2_mean).reshape(-1)

    # Variance selector: varv[:, D+d] = (1/M) * sum_m sq[:, D + m*D + d].
    svar = np.zeros((out_lanes, out_lanes), np.float32)
    rows = D + np.arange(M * D)
    cols = D + (np.arange(M * D) % D)
    svar[rows, cols] = 1.0 / M

    return {
        "w1s": jnp.asarray(w1s, dtype=jnp.bfloat16),
        "w1m": jnp.asarray(w1m, dtype=jnp.bfloat16),
        "w1a": jnp.asarray(w1a, dtype=jnp.bfloat16),
        "b1": jnp.asarray(b1.reshape(1, M * Hd), dtype=jnp.float32),
        "w2p": jnp.asarray(w2p, dtype=jnp.bfloat16),
        "b2p": jnp.asarray(b2p, dtype=jnp.float32),
        "svar": jnp.asarray(svar, dtype=jnp.float32),
    }


# -----------------------------------------------------------------------------
# Forward wrapper.
# -----------------------------------------------------------------------------
@jax.jit
def ensemble_forward(state_hist, action_hist, mask_hist, packed):
    """Pallas implementation of MaskedDynamicsEnsemble.forward -> (mean, var)."""
    B, H, D = state_hist.shape
    A = action_hist.shape[-1]
    m_hd = packed["b1"].shape[-1]
    out_lanes = packed["w2p"].shape[-1]

    # Flatten histories (zero-copy reshapes); mask stays 1 byte/elem on its way in.
    s2 = state_hist.reshape(B, H * D).astype(jnp.float32)
    a2 = action_hist.reshape(B, H * A).astype(jnp.float32)
    m2 = mask_hist.reshape(B, H * D).astype(jnp.int8)

    n_tiles = (B + ROW_TILE - 1) // ROW_TILE
    rows_p = n_tiles * ROW_TILE
    pad = rows_p - B
    if pad:
        s2 = jnp.pad(s2, ((0, pad), (0, 0)))
        a2 = jnp.pad(a2, ((0, pad), (0, 0)))
        m2 = jnp.pad(m2, ((0, pad), (0, 0)))

    row_spec = lambda cols: pl.BlockSpec((ROW_TILE, cols), lambda r: (r, 0))
    const_spec = lambda shape: pl.BlockSpec(shape, lambda r: (0, 0))  # VMEM-resident

    out = pl.pallas_call(
        _make_ensemble_kernel(D),
        grid=(n_tiles,),
        in_specs=[
            row_spec(H * D),                      # s2
            row_spec(H * D),                      # m2 (int8)
            row_spec(H * A),                      # a2
            const_spec((H * D, m_hd)),            # w1s (DMA'd once, reused every step)
            const_spec((H * D, m_hd)),            # w1m
            const_spec((H * A, m_hd)),            # w1a
            const_spec((1, m_hd)),                # b1
            const_spec((m_hd, out_lanes)),        # w2p
            const_spec((1, out_lanes)),           # b2p
            const_spec((out_lanes, out_lanes)),   # svar
        ],
        out_specs=pl.BlockSpec((ROW_TILE, out_lanes), lambda r: (r, 0)),
        out_shape=jax.ShapeDtypeStruct((rows_p, out_lanes), jnp.float32),
        compiler_params=pltpu.CompilerParams(
            dimension_semantics=("parallel",)),   # row tiles -> both TCs on v7x
    )(s2, m2, a2,
      packed["w1s"], packed["w1m"], packed["w1a"], packed["b1"],
      packed["w2p"], packed["b2p"], packed["svar"])

    return out[:B, :D], out[:B, D:2 * D]


# -----------------------------------------------------------------------------
# Pure-JAX reference (same math, original weight layout) for a correctness check.
# -----------------------------------------------------------------------------
def ensemble_forward_ref(state_hist, action_hist, mask_hist, params):
    B, H, D = state_hist.shape
    mask_f = mask_hist.astype(jnp.float32)
    feats = jnp.concatenate([state_hist * mask_f, mask_f, action_hist], axis=-1)
    x = feats.reshape(B, -1).astype(jnp.float32)
    h = jnp.maximum(jnp.einsum("bf,mfh->mbh", x, params["w1"]) + params["b1"], 0.0)
    p = jnp.einsum("mbh,mhd->mbd", h, params["w2"]) + params["b2"]
    return p.mean(axis=0), p.var(axis=0)   # var: unbiased=False


def init_params(key):
    k1, k2, k3, k4 = jax.random.split(key, 4)
    scale1 = 1.0 / jnp.sqrt(jnp.float32(FEAT_DIM))
    scale2 = 1.0 / jnp.sqrt(jnp.float32(HIDDEN))
    return {
        "w1": jax.random.normal(k1, (NUM_MODELS, FEAT_DIM, HIDDEN), jnp.float32) * scale1,
        "b1": jax.random.normal(k2, (NUM_MODELS, 1, HIDDEN), jnp.float32) * 0.01,
        "w2": jax.random.normal(k3, (NUM_MODELS, HIDDEN, STATE_DIM), jnp.float32) * scale2,
        "b2": jax.random.normal(k4, (NUM_MODELS, 1, STATE_DIM), jnp.float32) * 0.01,
    }


if __name__ == "__main__":
    key = jax.random.PRNGKey(0)
    kp, ks, ka, km = jax.random.split(key, 4)

    params = init_params(kp)
    packed = pack_ensemble_params(params, WINDOW_H, STATE_DIM, ACTION_DIM)

    state_hist = jax.random.normal(ks, (BATCH, WINDOW_H, STATE_DIM), jnp.float32)
    action_hist = jax.random.normal(ka, (BATCH, WINDOW_H, ACTION_DIM), jnp.float32)
    mask_hist = jax.random.bernoulli(km, 0.8, (BATCH, WINDOW_H, STATE_DIM))

    mean, var = jax.block_until_ready(
        ensemble_forward(state_hist, action_hist, mask_hist, packed))

    mean_ref, var_ref = ensemble_forward_ref(state_hist, action_hist, mask_hist, params)
    # bf16 weights / MXU operands are an intentional precision change vs the f32
    # reference (per review); tolerances loosened from 1e-4 accordingly.
    assert jnp.allclose(mean, mean_ref, atol=5e-2, rtol=5e-2), "mean mismatch"
    assert jnp.allclose(var, var_ref, atol=5e-2, rtol=5e-2), "var mismatch"

    print("KERNEL_OK")
</pallas_src>

<mosaic_0001>
module attributes {stable_mosaic.version = 11 : i64} {
  func.func @kernel(%arg0: i32, %arg1: memref<128x64xf32, #tpu.memory_space<vmem>>, %arg2: memref<128x64xi8, #tpu.memory_space<vmem>>, %arg3: memref<128x32xf32, #tpu.memory_space<vmem>>, %arg4: memref<64x512xbf16, #tpu.memory_space<vmem>>, %arg5: memref<64x512xbf16, #tpu.memory_space<vmem>>, %arg6: memref<32x512xbf16, #tpu.memory_space<vmem>>, %arg7: memref<1x512xf32, #tpu.memory_space<vmem>>, %arg8: memref<512x128xbf16, #tpu.memory_space<vmem>>, %arg9: memref<1x128xf32, #tpu.memory_space<vmem>>, %arg10: memref<128x128xf32, #tpu.memory_space<vmem>>, %arg11: memref<128x128xf32, #tpu.memory_space<vmem>>) attributes {dimension_semantics = [#tpu.dimension_semantics<parallel>], iteration_bounds = array<i64: 2>, scalar_prefetch = 0 : i64, scratch_operands = 0 : i64, tpu.core_type = #tpu.core_type<tc>, window_params = [{transform_indices = @transform_0, window_bounds = array<i64: 128, 64>}, {transform_indices = @transform_1, window_bounds = array<i64: 128, 64>}, {transform_indices = @transform_2, window_bounds = array<i64: 128, 32>}, {pipeline_mode = #tpu.pipeline_mode<synchronous>, transform_indices = @transform_3, window_bounds = array<i64: 64, 512>}, {pipeline_mode = #tpu.pipeline_mode<synchronous>, transform_indices = @transform_4, window_bounds = array<i64: 64, 512>}, {pipeline_mode = #tpu.pipeline_mode<synchronous>, transform_indices = @transform_5, window_bounds = array<i64: 32, 512>}, {pipeline_mode = #tpu.pipeline_mode<synchronous>, transform_indices = @transform_6, window_bounds = array<i64: 1, 512>}, {pipeline_mode = #tpu.pipeline_mode<synchronous>, transform_indices = @transform_7, window_bounds = array<i64: 512, 128>}, {pipeline_mode = #tpu.pipeline_mode<synchronous>, transform_indices = @transform_8, window_bounds = array<i64: 1, 128>}, {pipeline_mode = #tpu.pipeline_mode<synchronous>, transform_indices = @transform_9, window_bounds = array<i64: 128, 128>}, {transform_indices = @transform_10, window_bounds = array<i64: 128, 128>}]} {
    %c0 = arith.constant 0 : index
    %c0_0 = arith.constant 0 : index
    %0 = vector.load %arg1[%c0, %c0_0] : memref<128x64xf32, #tpu.memory_space<vmem>>, vector<128x64xf32>
    %c0_1 = arith.constant 0 : index
    %c0_2 = arith.constant 0 : index
    %1 = vector.load %arg2[%c0_1, %c0_2] : memref<128x64xi8, #tpu.memory_space<vmem>>, vector<128x64xi8>
    %2 = arith.sitofp %1 : vector<128x64xi8> to vector<128x64xf32>
    %c0_3 = arith.constant 0 : index
    %c0_4 = arith.constant 0 : index
    %3 = vector.load %arg3[%c0_3, %c0_4] : memref<128x32xf32, #tpu.memory_space<vmem>>, vector<128x32xf32>
    %4 = arith.mulf %0, %2 : vector<128x64xf32>
    %5 = arith.truncf %4 : vector<128x64xf32> to vector<128x64xbf16>
    %6 = arith.truncf %2 : vector<128x64xf32> to vector<128x64xbf16>
    %7 = arith.truncf %3 : vector<128x32xf32> to vector<128x32xbf16>
    %c0_5 = arith.constant 0 : index
    %c0_6 = arith.constant 0 : index
    %8 = vector.load %arg4[%c0_5, %c0_6] : memref<64x512xbf16, #tpu.memory_space<vmem>>, vector<64x512xbf16>
    %cst = arith.constant dense<0.000000e+00> : vector<128x512xf32>
    %9 = tpu.matmul %5, %8, %cst {dimension_numbers = #tpu.dot_dimension_numbers<[1], [0], [0], [1], [0, 0, 1, 1], [], []>} : vector<128x64xbf16>, vector<64x512xbf16>, vector<128x512xf32> -> vector<128x512xf32>
    %c0_7 = arith.constant 0 : index
    %c0_8 = arith.constant 0 : index
    %10 = vector.load %arg5[%c0_7, %c0_8] : memref<64x512xbf16, #tpu.memory_space<vmem>>, vector<64x512xbf16>
    %cst_9 = arith.constant dense<0.000000e+00> : vector<128x512xf32>
    %11 = tpu.matmul %6, %10, %cst_9 {dimension_numbers = #tpu.dot_dimension_numbers<[1], [0], [0], [1], [0, 0, 1, 1], [], []>} : vector<128x64xbf16>, vector<64x512xbf16>, vector<128x512xf32> -> vector<128x512xf32>
    %12 = arith.addf %9, %11 : vector<128x512xf32>
    %c0_10 = arith.constant 0 : index
    %c0_11 = arith.constant 0 : index
    %13 = vector.load %arg6[%c0_10, %c0_11] : memref<32x512xbf16, #tpu.memory_space<vmem>>, vector<32x512xbf16>
    %cst_12 = arith.constant dense<0.000000e+00> : vector<128x512xf32>
    %14 = tpu.matmul %7, %13, %cst_12 {dimension_numbers = #tpu.dot_dimension_numbers<[1], [0], [0], [1], [0, 0, 1, 1], [], []>} : vector<128x32xbf16>, vector<32x512xbf16>, vector<128x512xf32> -> vector<128x512xf32>
    %15 = arith.addf %12, %14 : vector<128x512xf32>
    %c0_13 = arith.constant 0 : index
    %c0_14 = arith.constant 0 : index
    %16 = vector.load %arg7[%c0_13, %c0_14] : memref<1x512xf32, #tpu.memory_space<vmem>>, vector<1x512xf32>
    %17 = vector.broadcast %16 : vector<1x512xf32> to vector<128x512xf32>
    %18 = arith.addf %15, %17 : vector<128x512xf32>
    %cst_15 = arith.constant 0.000000e+00 : f32
    %19 = vector.broadcast %cst_15 : f32 to vector<128x512xf32>
    %20 = arith.maximumf %18, %19 : vector<128x512xf32>
    %21 = arith.truncf %20 : vector<128x512xf32> to vector<128x512xbf16>
    %c0_16 = arith.constant 0 : index
    %c0_17 = arith.constant 0 : index
    %22 = vector.load %arg8[%c0_16, %c0_17] : memref<512x128xbf16, #tpu.memory_space<vmem>>, vector<512x128xbf16>
    %cst_18 = arith.constant dense<0.000000e+00> : vector<128x128xf32>
    %23 = tpu.matmul %21, %22, %cst_18 {dimension_numbers = #tpu.dot_dimension_numbers<[1], [0], [0], [1], [0, 0, 1, 1], [], []>} : vector<128x512xbf16>, vector<512x128xbf16>, vector<128x128xf32> -> vector<128x128xf32>
    %c0_19 = arith.constant 0 : index
    %c0_20 = arith.constant 0 : index
    %24 = vector.load %arg9[%c0_19, %c0_20] : memref<1x128xf32, #tpu.memory_space<vmem>>, vector<1x128xf32>
    %25 = vector.broadcast %24 : vector<1x128xf32> to vector<128x128xf32>
    %26 = arith.addf %23, %25 : vector<128x128xf32>
    %27 = arith.mulf %26, %26 : vector<128x128xf32>
    %c0_21 = arith.constant 0 : index
    %c0_22 = arith.constant 0 : index
    %28 = vector.load %arg10[%c0_21, %c0_22] : memref<128x128xf32, #tpu.memory_space<vmem>>, vector<128x128xf32>
    %cst_23 = arith.constant dense<0.000000e+00> : vector<128x128xf32>
    %29 = tpu.matmul %27, %28, %cst_23 {dimension_numbers = #tpu.dot_dimension_numbers<[1], [0], [0], [1], [0, 0, 1, 1], [], []>} : vector<128x128xf32>, vector<128x128xf32>, vector<128x128xf32> -> vector<128x128xf32>
    %30 = tpu.iota {dimensions = array<i32: 1>} : vector<128x128xi32>
    %c16_i32 = arith.constant 16 : i32
    %31 = vector.broadcast %c16_i32 : i32 to vector<128x128xi32>
    %32 = arith.cmpi slt, %30, %31 : vector<128x128xi32>
    %33 = arith.select %32, %26, %29 : vector<128x128xi1>, vector<128x128xf32>
    %c0_24 = arith.constant 0 : index
    %c0_25 = arith.constant 0 : index
    %34 = vector.load %arg11[%c0_24, %c0_25] : memref<128x128xf32, #tpu.memory_space<vmem>>, vector<128x128xf32>
    tpu.vector_store %arg11[%c0_24, %c0_25], %33 {strides = array<i32>} : memref<128x128xf32, #tpu.memory_space<vmem>>, vector<128x128xf32>,
    return
  }
  func.func @transform_0(%arg0: i32) -> (i32, i32) {
    %c0_i32 = arith.constant 0 : i32
    %c0_i32_0 = arith.constant 0 : i32
    return %arg0, %c0_i32 : i32, i32
  }
  func.func @transform_1(%arg0: i32) -> (i32, i32) {
    %c0_i32 = arith.constant 0 : i32
    %c0_i32_0 = arith.constant 0 : i32
    return %arg0, %c0_i32 : i32, i32
  }
  func.func @transform_2(%arg0: i32) -> (i32, i32) {
    %c0_i32 = arith.constant 0 : i32
    %c0_i32_0 = arith.constant 0 : i32
    return %arg0, %c0_i32 : i32, i32
  }
  func.func @transform_3(%arg0: i32) -> (i32, i32) {
    %c0_i32 = arith.constant 0 : i32
    %c0_i32_0 = arith.constant 0 : i32
    %c0_i32_1 = arith.constant 0 : i32
    return %c0_i32, %c0_i32_0 : i32, i32
  }
  func.func @transform_4(%arg0: i32) -> (i32, i32) {
    %c0_i32 = arith.constant 0 : i32
    %c0_i32_0 = arith.constant 0 : i32
    %c0_i32_1 = arith.constant 0 : i32
    return %c0_i32, %c0_i32_0 : i32, i32
  }
  func.func @transform_5(%arg0: i32) -> (i32, i32) {
    %c0_i32 = arith.constant 0 : i32
    %c0_i32_0 = arith.constant 0 : i32
    %c0_i32_1 = arith.constant 0 : i32
    return %c0_i32, %c0_i32_0 : i32, i32
  }
  func.func @transform_6(%arg0: i32) -> (i32, i32) {
    %c0_i32 = arith.constant 0 : i32
    %c0_i32_0 = arith.constant 0 : i32
    %c0_i32_1 = arith.constant 0 : i32
    return %c0_i32, %c0_i32_0 : i32, i32
  }
  func.func @transform_7(%arg0: i32) -> (i32, i32) {
    %c0_i32 = arith.constant 0 : i32
    %c0_i32_0 = arith.constant 0 : i32
    %c0_i32_1 = arith.constant 0 : i32
    return %c0_i32, %c0_i32_0 : i32, i32
  }
  func.func @transform_8(%arg0: i32) -> (i32, i32) {
    %c0_i32 = arith.constant 0 : i32
    %c0_i32_0 = arith.constant 0 : i32
    %c0_i32_1 = arith.constant 0 : i32
    return %c0_i32, %c0_i32_0 : i32, i32
  }
  func.func @transform_9(%arg0: i32) -> (i32, i32) {
    %c0_i32 = arith.constant 0 : i32
    %c0_i32_0 = arith.constant 0 : i32
    %c0_i32_1 = arith.constant 0 : i32
    return %c0_i32, %c0_i32_0 : i32, i32
  }
  func.func @transform_10(%arg0: i32) -> (i32, i32) {
    %c0_i32 = arith.constant 0 : i32
    %c0_i32_0 = arith.constant 0 : i32
    return %arg0, %c0_i32 : i32, i32
  }
}

</mosaic_0001>

<llo_original>
// kernel: ensemble_forward.1
$region0: #{ensemble_forward.1}
  #allocation0 [shape = 'u32[]', space=smem, size = 0x4, offset = 0x4, fixed_abs, tag = 'smem constant byte address 0x4 - core index']
  #allocation1 [shape = 'u32[144,128]{1,0:T(1,128)}', space=vmem, size = 0x12000, scoped, tag = 'internal scratch']
  %s0 = inlined_call_operand.vmem [shape: f32[256,64], index: 0, kind: input, shape index: {}]
  %s1 = inlined_call_operand.vmem [shape: s8[256,64], index: 1, kind: input, shape index: {}]
  %s2 = inlined_call_operand.vmem [shape: f32[256,32], index: 2, kind: input, shape index: {}]
  %s3 = inlined_call_operand.vmem [shape: bf16[64,512], index: 3, kind: input, shape index: {}]
  %s4 = inlined_call_operand.vmem [shape: bf16[64,512], index: 4, kind: input, shape index: {}]
  %s5 = inlined_call_operand.vmem [shape: bf16[32,512], index: 5, kind: input, shape index: {}]
  %s6 = inlined_call_operand.vmem [shape: f32[1,512], index: 6, kind: input, shape index: {}]
  %s7 = inlined_call_operand.vmem [shape: bf16[512,128], index: 7, kind: input, shape index: {}]
  %s8 = inlined_call_operand.vmem [shape: f32[1,128], index: 8, kind: input, shape index: {}]
  %s9 = inlined_call_operand.vmem [shape: f32[128,128], index: 9, kind: input, shape index: {}]
  %s10 = inlined_call_operand.vmem [shape: f32[256,128], index: 10, kind: output, shape index: {}]
  %s11 = sld [smem:[#allocation0]]
  $region73: #{ensemble_forward.1} parent=0
    _
  %s13 = ssub.s32 1, %s11
  %s14 = scalar_select 0, %s13, %s11
  loop: start=0, step=1, limit=4
  $region2: #{ensemble_forward.1} parent=0 // loop_pre_header
    _
  $region3: #{ensemble_forward.1} parent=0 // loop_header
    %s16 = sphi 0, %s20
    %p17 = scmp.ge.s32.totalorder %s16, 4
    %s26 = sphi 0, %s28
    %s29 = sphi 0, %s26
    %s30 = sphi 0, %s29
    %s46 = sphi 0, %s30
    %s52 = sphi 0, %s54
    %s55 = sphi 0, %s52
    %s56 = sphi 0, %s55
    %s72 = sphi 0, %s56
    %s78 = sphi 0, %s80
    %s81 = sphi 0, %s78
    %s82 = sphi 0, %s81
    %s98 = sphi 0, %s82
    %s102 = sphi 0, %s102
    %s104 = sphi 0, %s102
    %s105 = sphi 0, %s104
    %s119 = sphi 0, %s105
    %s123 = sphi 0, %s123
    %s125 = sphi 0, %s123
    %s126 = sphi 0, %s125
    %s140 = sphi 0, %s126
    %s144 = sphi 0, %s144
    %s146 = sphi 0, %s144
    %s147 = sphi 0, %s146
    %s161 = sphi 0, %s147
    %s165 = sphi 0, %s165
    %s167 = sphi 0, %s165
    %s168 = sphi 0, %s167
    %s182 = sphi 0, %s168
    %s186 = sphi 0, %s186
    %s188 = sphi 0, %s186
    %s189 = sphi 0, %s188
    %s203 = sphi 0, %s189
    %s207 = sphi 0, %s207
    %s209 = sphi 0, %s207
    %s210 = sphi 0, %s209
    %s224 = sphi 0, %s210
    %s228 = sphi 0, %s228
    %s230 = sphi 0, %s228
    %s231 = sphi 0, %s230
    %s245 = sphi 0, %s231
    %s251 = sphi 0, %s253
    %s254 = sphi 0, %s251
    %s255 = sphi 0, %s254
    %s271 = sphi 0, %s255
  $region4: #{ensemble_forward.1} parent=0 // loop_header_branch
    %19 = sbr.rel (%p17) target = $region8
  $region5: #{ensemble_forward.1} parent=0 // loop_body
    %s21 = ssub.s32 %s16, 1
    %s22 = ssub.s32 %s16, 2
    %s23 = sadd.s32 %s16, 1
    %s24 = ssub.s32 %s16, %s23
    %p25 = scmp.eq.s32.totalorder %s24, 0
    %s27 = sadd.s32 %s26, 1
    %s28 = scalar_select %p25, %s26, %s27
    %p31 = pneg %p25
    %p32 = scmp.eq.s32.totalorder %s16, 1
    %p33 = por %p31, %p32
    %p34 = scmp.ne.s32.totalorder %s26, %s29
    %p35 = scmp.eq.s32.totalorder %s16, 0
    %p36 = por %p34, %p35
    %p37 = scmp.ne.s32.totalorder %s26, %s29
    %p38 = scmp.eq.s32.totalorder %s21, 1
    %p39 = por %p37, %p38
    %p40 = scmp.ne.s32.totalorder %s29, %s30
    %p41 = scmp.eq.s32.totalorder %s21, 0
    %p42 = por %p40, %p41
    %p43 = scmp.ne.s32.totalorder %s29, %s30
    %p44 = scmp.eq.s32.totalorder %s22, 1
    %p45 = por %p43, %p44
    %p47 = scmp.ne.s32.totalorder %s30, %s46
    %p48 = scmp.eq.s32.totalorder %s22, 0
    %p49 = por %p47, %p48
    %s50 = ssub.s32 %s16, %s23
    %p51 = scmp.eq.s32.totalorder %s50, 0
    %s53 = sadd.s32 %s52, 1
    %s54 = scalar_select %p51, %s52, %s53
    %p57 = pneg %p51
    %p58 = scmp.eq.s32.totalorder %s16, 1
    %p59 = por %p57, %p58
    %p60 = scmp.ne.s32.totalorder %s52, %s55
    %p61 = scmp.eq.s32.totalorder %s16, 0
    %p62 = por %p60, %p61
    %p63 = scmp.ne.s32.totalorder %s52, %s55
    %p64 = scmp.eq.s32.totalorder %s21, 1
    %p65 = por %p63, %p64
    %p66 = scmp.ne.s32.totalorder %s55, %s56
    %p67 = scmp.eq.s32.totalorder %s21, 0
    %p68 = por %p66, %p67
    %p69 = scmp.ne.s32.totalorder %s55, %s56
    %p70 = scmp.eq.s32.totalorder %s22, 1
    %p71 = por %p69, %p70
    %p73 = scmp.ne.s32.totalorder %s56, %s72
    %p74 = scmp.eq.s32.totalorder %s22, 0
    %p75 = por %p73, %p74
    %s76 = ssub.s32 %s16, %s23
    %p77 = scmp.eq.s32.totalorder %s76, 0
    %s79 = sadd.s32 %s78, 1
    %s80 = scalar_select %p77, %s78, %s79
    %p83 = pneg %p77
    %p84 = scmp.eq.s32.totalorder %s16, 1
    %p85 = por %p83, %p84
    %p86 = scmp.ne.s32.totalorder %s78, %s81
    %p87 = scmp.eq.s32.totalorder %s16, 0
    %p88 = por %p86, %p87
    %p89 = scmp.ne.s32.totalorder %s78, %s81
    %p90 = scmp.eq.s32.totalorder %s21, 1
    %p91 = por %p89, %p90
    %p92 = scmp.ne.s32.totalorder %s81, %s82
    %p93 = scmp.eq.s32.totalorder %s21, 0
    %p94 = por %p92, %p93
    %p95 = scmp.ne.s32.totalorder %s81, %s82
    %p96 = scmp.eq.s32.totalorder %s22, 1
    %p97 = por %p95, %p96
    %p99 = scmp.ne.s32.totalorder %s82, %s98
    %p100 = scmp.eq.s32.totalorder %s22, 0
    %p101 = por %p99, %p100
    %s103 = sadd.s32 %s102, 1
    %p106 = scmp.eq.s32.totalorder %s16, 1
    %p107 = scmp.ne.s32.totalorder %s102, %s104
    %p108 = scmp.eq.s32.totalorder %s16, 0
    %p109 = por %p107, %p108
    %p110 = scmp.ne.s32.totalorder %s102, %s104
    %p111 = scmp.eq.s32.totalorder %s21, 1
    %p112 = por %p110, %p111
    %p113 = scmp.ne.s32.totalorder %s104, %s105
    %p114 = scmp.eq.s32.totalorder %s21, 0
    %p115 = por %p113, %p114
    %p116 = scmp.ne.s32.totalorder %s104, %s105
    %p117 = scmp.eq.s32.totalorder %s22, 1
    %p118 = por %p116, %p117
    %p120 = scmp.ne.s32.totalorder %s105, %s119
    %p121 = scmp.eq.s32.totalorder %s22, 0
    %p122 = por %p120, %p121
    %s124 = sadd.s32 %s123, 1
    %p127 = scmp.eq.s32.totalorder %s16, 1
    %p128 = scmp.ne.s32.totalorder %s123, %s125
    %p129 = scmp.eq.s32.totalorder %s16, 0
    %p130 = por %p128, %p129
    %p131 = scmp.ne.s32.totalorder %s123, %s125
    %p132 = scmp.eq.s32.totalorder %s21, 1
    %p133 = por %p131, %p132
    %p134 = scmp.ne.s32.totalorder %s125, %s126
    %p135 = scmp.eq.s32.totalorder %s21, 0
    %p136 = por %p134, %p135
    %p137 = scmp.ne.s32.totalorder %s125, %s126
    %p138 = scmp.eq.s32.totalorder %s22, 1
    %p139 = por %p137, %p138
    %p141 = scmp.ne.s32.totalorder %s126, %s140
    %p142 = scmp.eq.s32.totalorder %s22, 0
    %p143 = por %p141, %p142
    %s145 = sadd.s32 %s144, 1
    %p148 = scmp.eq.s32.totalorder %s16, 1
    %p149 = scmp.ne.s32.totalorder %s144, %s146
    %p150 = scmp.eq.s32.totalorder %s16, 0
    %p151 = por %p149, %p150
    %p152 = scmp.ne.s32.totalorder %s144, %s146
    %p153 = scmp.eq.s32.totalorder %s21, 1
    %p154 = por %p152, %p153
    %p155 = scmp.ne.s32.totalorder %s146, %s147
    %p156 = scmp.eq.s32.totalorder %s21, 0
    %p157 = por %p155, %p156
    %p158 = scmp.ne.s32.totalorder %s146, %s147
    %p159 = scmp.eq.s32.totalorder %s22, 1
    %p160 = por %p158, %p159
    %p162 = scmp.ne.s32.totalorder %s147, %s161
    %p163 = scmp.eq.s32.totalorder %s22, 0
    %p164 = por %p162, %p163
    %s166 = sadd.s32 %s165, 1
    %p169 = scmp.eq.s32.totalorder %s16, 1
    %p170 = scmp.ne.s32.totalorder %s165, %s167
    %p171 = scmp.eq.s32.totalorder %s16, 0
    %p172 = por %p170, %p171
    %p173 = scmp.ne.s32.totalorder %s165, %s167
    %p174 = scmp.eq.s32.totalorder %s21, 1
    %p175 = por %p173, %p174
    %p176 = scmp.ne.s32.totalorder %s167, %s168
    %p177 = scmp.eq.s32.totalorder %s21, 0
    %p178 = por %p176, %p177
    %p179 = scmp.ne.s32.totalorder %s167, %s168
    %p180 = scmp.eq.s32.totalorder %s22, 1
    %p181 = por %p179, %p180
    %p183 = scmp.ne.s32.totalorder %s168, %s182
    %p184 = scmp.eq.s32.totalorder %s22, 0
    %p185 = por %p183, %p184
    %s187 = sadd.s32 %s186, 1
    %p190 = scmp.eq.s32.totalorder %s16, 1
    %p191 = scmp.ne.s32.totalorder %s186, %s188
    %p192 = scmp.eq.s32.totalorder %s16, 0
    %p193 = por %p191, %p192
    %p194 = scmp.ne.s32.totalorder %s186, %s188
    %p195 = scmp.eq.s32.totalorder %s21, 1
    %p196 = por %p194, %p195
    %p197 = scmp.ne.s32.totalorder %s188, %s189
    %p198 = scmp.eq.s32.totalorder %s21, 0
    %p199 = por %p197, %p198
    %p200 = scmp.ne.s32.totalorder %s188, %s189
    %p201 = scmp.eq.s32.totalorder %s22, 1
    %p202 = por %p200, %p201
    %p204 = scmp.ne.s32.totalorder %s189, %s203
    %p205 = scmp.eq.s32.totalorder %s22, 0
    %p206 = por %p204, %p205
    %s208 = sadd.s32 %s207, 1
    %p211 = scmp.eq.s32.totalorder %s16, 1
    %p212 = scmp.ne.s32.totalorder %s207, %s209
    %p213 = scmp.eq.s32.totalorder %s16, 0
    %p214 = por %p212, %p213
    %p215 = scmp.ne.s32.totalorder %s207, %s209
    %p216 = scmp.eq.s32.totalorder %s21, 1
    %p217 = por %p215, %p216
    %p218 = scmp.ne.s32.totalorder %s209, %s210
    %p219 = scmp.eq.s32.totalorder %s21, 0
    %p220 = por %p218, %p219
    %p221 = scmp.ne.s32.totalorder %s209, %s210
    %p222 = scmp.eq.s32.totalorder %s22, 1
    %p223 = por %p221, %p222
    %p225 = scmp.ne.s32.totalorder %s210, %s224
    %p226 = scmp.eq.s32.totalorder %s22, 0
    %p227 = por %p225, %p226
    %s229 = sadd.s32 %s228, 1
    %p232 = scmp.eq.s32.totalorder %s16, 1
    %p233 = scmp.ne.s32.totalorder %s228, %s230
    %p234 = scmp.eq.s32.totalorder %s16, 0
    %p235 = por %p233, %p234
    %p236 = scmp.ne.s32.totalorder %s228, %s230
    %p237 = scmp.eq.s32.totalorder %s21, 1
    %p238 = por %p236, %p237
    %p239 = scmp.ne.s32.totalorder %s230, %s231
    %p240 = scmp.eq.s32.totalorder %s21, 0
    %p241 = por %p239, %p240
    %p242 = scmp.ne.s32.totalorder %s230, %s231
    %p243 = scmp.eq.s32.totalorder %s22, 1
    %p244 = por %p242, %p243
    %p246 = scmp.ne.s32.totalorder %s231, %s245
    %p247 = scmp.eq.s32.totalorder %s22, 0
    %p248 = por %p246, %p247
    %s249 = ssub.s32 %s16, %s23
    %p250 = scmp.eq.s32.totalorder %s249, 0
    %s252 = sadd.s32 %s251, 1
    %s253 = scalar_select %p250, %s251, %s252
    %p256 = pneg %p250
    %p257 = scmp.eq.s32.totalorder %s16, 1
    %p258 = por %p256, %p257
    %p259 = scmp.ne.s32.totalorder %s251, %s254
    %p260 = scmp.eq.s32.totalorder %s16, 0
    %p261 = por %p259, %p260
    %p262 = scmp.ne.s32.totalorder %s251, %s254
    %p263 = scmp.eq.s32.totalorder %s21, 1
    %p264 = por %p262, %p263
    %p265 = scmp.ne.s32.totalorder %s254, %s255
    %p266 = scmp.eq.s32.totalorder %s21, 0
    %p267 = por %p265, %p266
    %p268 = scmp.ne.s32.totalorder %s254, %s255
    %p269 = scmp.eq.s32.totalorder %s22, 1
    %p270 = por %p268, %p269
    %p272 = scmp.ne.s32.totalorder %s255, %s271
    %p273 = scmp.eq.s32.totalorder %s22, 0
    %p274 = por %p272, %p273
    %p275 = scmp.le.s32.totalorder 1, %s16
    %p276 = scmp.lt.s32.totalorder %s16, 3
    %p277 = pnand %p275, %p276
    %p278 = pneg %p277
    // Predicated region
    $region9: #{ensemble_forward.1} parent=5 // pred_check
      _
    $region10: #{ensemble_forward.1} parent=5 // pred_check_branch
      %280 = sbr.rel (%p277) target = $region12
    $region11: #{ensemble_forward.1} parent=5 // pred_region
      %s281 = ssub.s32 %s16, 1
      // Predicated region
      $region13: #{ensemble_forward.1} parent=11 // pred_check
        %p282 = pneg %p115
      $region14: #{ensemble_forward.1} parent=11 // pred_check_branch
        %284 = sbr.rel (%p282) target = $region16
      $region15: #{ensemble_forward.1} parent=11 // pred_region
        _
      $region16: #{ensemble_forward.1} parent=11 // pred_fallthru
        _
      // Predicated region
      $region17: #{ensemble_forward.1} parent=11 // pred_check
        %p285 = pneg %p136
      $region18: #{ensemble_forward.1} parent=11 // pred_check_branch
        %287 = sbr.rel (%p285) target = $region20
      $region19: #{ensemble_forward.1} parent=11 // pred_region
        _
      $region20: #{ensemble_forward.1} parent=11 // pred_fallthru
        _
      // Predicated region
      $region21: #{ensemble_forward.1} parent=11 // pred_check
        %p288 = pneg %p157
      $region22: #{ensemble_forward.1} parent=11 // pred_check_branch
        %290 = sbr.rel (%p288) target = $region24
      $region23: #{ensemble_forward.1} parent=11 // pred_region
        _
      $region24: #{ensemble_forward.1} parent=11 // pred_fallthru
        _
      // Predicated region
      $region25: #{ensemble_forward.1} parent=11 // pred_check
        %p291 = pneg %p178
      $region26: #{ensemble_forward.1} parent=11 // pred_check_branch
        %293 = sbr.rel (%p291) target = $region28
      $region27: #{ensemble_forward.1} parent=11 // pred_region
        _
      $region28: #{ensemble_forward.1} parent=11 // pred_fallthru
        _
      // Predicated region
      $region29: #{ensemble_forward.1} parent=11 // pred_check
        %p294 = pneg %p199
      $region30: #{ensemble_forward.1} parent=11 // pred_check_branch
        %296 = sbr.rel (%p294) target = $region32
      $region31: #{ensemble_forward.1} parent=11 // pred_region
        _
      $region32: #{ensemble_forward.1} parent=11 // pred_fallthru
        _
      // Predicated region
      $region33: #{ensemble_forward.1} parent=11 // pred_check
        %p297 = pneg %p220
      $region34: #{ensemble_forward.1} parent=11 // pred_check_branch
        %299 = sbr.rel (%p297) target = $region36
      $region35: #{ensemble_forward.1} parent=11 // pred_region
        _
      $region36: #{ensemble_forward.1} parent=11 // pred_fallthru
        _
      // Predicated region
      $region37: #{ensemble_forward.1} parent=11 // pred_check
        %p300 = pneg %p241
      $region38: #{ensemble_forward.1} parent=11 // pred_check_branch
        %302 = sbr.rel (%p300) target = $region40
      $region39: #{ensemble_forward.1} parent=11 // pred_region
        _
      $region40: #{ensemble_forward.1} parent=11 // pred_fallthru
        _
    $region12: #{ensemble_forward.1} parent=5 // pred_fallthru
      _
    %p303 = scmp.lt.s32.totalorder %s16, 2
    // Predicated region
    $region41: #{ensemble_forward.1} parent=5 // pred_check
      %p304 = pneg %p303
    $region42: #{ensemble_forward.1} parent=5 // pred_check_branch
      %306 = sbr.rel (%p304) target = $region44
    $region43: #{ensemble_forward.1} parent=5 // pred_region
      // Predicated region
      $region45: #{ensemble_forward.1} parent=43 // pred_check
        %p307 = pneg %p36
      $region46: #{ensemble_forward.1} parent=43 // pred_check_branch
        %309 = sbr.rel (%p307) target = $region48
      $region47: #{ensemble_forward.1} parent=43 // pred_region
        %s310 = smul.u32 16, %s16
        %p311 = scmp.lt.s32.totalorder %s310, 31
        %s312 = scalar_select %p311, %s310, 31
        %s313 = smul.addr %s312, 8
        %s314 = scalar_lea.vmem %s0, %s313
        %s315 = smul.u32 16, %s16
      $region48: #{ensemble_forward.1} parent=43 // pred_fallthru
        _
      // Predicated region
      $region49: #{ensemble_forward.1} parent=43 // pred_check
        %p316 = pneg %p62
      $region50: #{ensemble_forward.1} parent=43 // pred_check_branch
        %318 = sbr.rel (%p316) target = $region52
      $region51: #{ensemble_forward.1} parent=43 // pred_region
        %s319 = smul.u32 4, %s16
        %p320 = scmp.lt.s32.totalorder %s319, 7
        %s321 = scalar_select %p320, %s319, 7
        %s322 = smul.addr %s321, 8
        %s323 = scalar_lea.vmem %s1, %s322
        %s324 = smul.u32 4, %s16
      $region52: #{ensemble_forward.1} parent=43 // pred_fallthru
        _
      // Predicated region
      $region53: #{ensemble_forward.1} parent=43 // pred_check
        %p325 = pneg %p88
      $region54: #{ensemble_forward.1} parent=43 // pred_check_branch
        %327 = sbr.rel (%p325) target = $region56
      $region55: #{ensemble_forward.1} parent=43 // pred_region
        %s328 = smul.u32 16, %s16
        %p329 = scmp.lt.s32.totalorder %s328, 31
        %s330 = scalar_select %p329, %s328, 31
        %s331 = smul.addr %s330, 8
        %s332 = scalar_lea.vmem %s2, %s331
        %s333 = smul.u32 16, %s16
      $region56: #{ensemble_forward.1} parent=43 // pred_fallthru
        _
    $region44: #{ensemble_forward.1} parent=5 // pred_fallthru
      _
    %p334 = scmp.le.s32.totalorder 1, %s16
    %p335 = scmp.lt.s32.totalorder %s16, 3
    %p336 = pnand %p334, %p335
    %p337 = pneg %p336
    // Predicated region
    $region57: #{ensemble_forward.1} parent=5 // pred_check
      _
    $region58: #{ensemble_forward.1} parent=5 // pred_check_branch
      %339 = sbr.rel (%p336) target = $region60
    $region59: #{ensemble_forward.1} parent=5 // pred_region
      %s340 = ssub.s32 %s16, 1
      %s341 = smul.u32 16, %s21
      %p342 = scmp.lt.s32.totalorder %s341, 31
      %s343 = scalar_select %p342, %s341, 31
      %s344 = smul.addr %s343, 8
      %s345 = scalar_lea.vmem %s0, %s344
      %p346 = pneg %p42
      %p347 = pneg %p39
      %s348 = smul.u32 4, %s21
      %p349 = scmp.lt.s32.totalorder %s348, 7
      %s350 = scalar_select %p349, %s348, 7
      %s351 = smul.addr %s350, 8
      %s352 = scalar_lea.vmem %s1, %s351
      %p353 = pneg %p68
      %p354 = pneg %p65
      %s355 = smul.u32 16, %s21
      %p356 = scmp.lt.s32.totalorder %s355, 31
      %s357 = scalar_select %p356, %s355, 31
      %s358 = smul.addr %s357, 8
      %s359 = scalar_lea.vmem %s2, %s358
      %p360 = pneg %p94
      %p361 = pneg %p91
      %p362 = pneg %p115
      %p363 = pneg %p112
      %p364 = pneg %p136
      %p365 = pneg %p133
      %p366 = pneg %p157
      %p367 = pneg %p154
      %p368 = pneg %p178
      %p369 = pneg %p175
      %p370 = pneg %p199
      %p371 = pneg %p196
      %p372 = pneg %p220
      %p373 = pneg %p217
      %p374 = pneg %p241
      %p375 = pneg %p238
      %p376 = pneg %p267
      %p377 = pneg %p264
      %s378 = smul.u32 16, %s21
      %p379 = scmp.lt.s32.totalorder %s378, 31
      %s380 = scalar_select %p379, %s378, 31
      %s381 = smul.addr %s380, 8
      %s382 = scalar_lea.vmem %s10, %s381
      %s383 = smul.u32 16, %s21
      %p384 = scmp.lt.s32.totalorder %s383, 31
      %s385 = scalar_select %p384, %s383, 31
      %s386 = smul.addr %s385, 8
      %s387 = scalar_lea.vmem %s0, %s386
      %s388 = smul.u32 16, %s21
      %s389 = smul.u32 4, %s21
      %p390 = scmp.lt.s32.totalorder %s389, 7
      %s391 = scalar_select %p390, %s389, 7
      %s392 = smul.addr %s391, 8
      %s393 = scalar_lea.vmem %s1, %s392
      %s394 = smul.u32 4, %s21
      %s395 = smul.u32 16, %s21
      %p396 = scmp.lt.s32.totalorder %s395, 31
      %s397 = scalar_select %p396, %s395, 31
      %s398 = smul.addr %s397, 8
      %s399 = scalar_lea.vmem %s2, %s398
      %s400 = smul.u32 16, %s21
      %s401 = smul.u32 16, %s21
      %p402 = scmp.lt.s32.totalorder %s401, 31
      %s403 = scalar_select %p402, %s401, 31
      %s404 = smul.addr %s403, 8
      %s405 = scalar_lea.vmem %s10, %s404
      %s406 = smul.u32 16, %s21
      %v408 = vld [vmem:[%s387] sm:$0xff]
      %v409 = vld [vmem:[%s387 + $0x8] sm:$0xff]
      %v410 = vld [vmem:[%s387 + $0x10] sm:$0xff]
      %v411 = vld [vmem:[%s387 + $0x18] sm:$0xff]
      %v412 = vld [vmem:[%s387 + $0x20] sm:$0xff]
      %v413 = vld [vmem:[%s387 + $0x28] sm:$0xff]
      %v414 = vld [vmem:[%s387 + $0x30] sm:$0xff]
      %v415 = vld [vmem:[%s387 + $0x38] sm:$0xff]
      %v416 = vld [vmem:[%s387 + $0x40] sm:$0xff]
      %v417 = vld [vmem:[%s387 + $0x48] sm:$0xff]
      %v418 = vld [vmem:[%s387 + $0x50] sm:$0xff]
      %v419 = vld [vmem:[%s387 + $0x58] sm:$0xff]
      %v420 = vld [vmem:[%s387 + $0x60] sm:$0xff]
      %v421 = vld [vmem:[%s387 + $0x68] sm:$0xff]
      %v422 = vld [vmem:[%s387 + $0x70] sm:$0xff]
      %v423 = vld [vmem:[%s387 + $0x78] sm:$0xff]
      %v424 = vld [vmem:[%s393] sm:$0xff]
      %v425 = vld [vmem:[%s393 + $0x8] sm:$0xff]
      %v426 = vld [vmem:[%s393 + $0x10] sm:$0xff]
      %v427 = vld [vmem:[%s393 + $0x18] sm:$0xff]
      %v428 = vunpack.c.0.s8 %v424
      %v429 = vunpack.c.1.s8 %v424
      %v430 = vunpack.c.2.s8 %v424
      %v431 = vunpack.c.3.s8 %v424
      %v432 = vunpack.c.0.s8 %v425
      %v433 = vunpack.c.1.s8 %v425
      %v434 = vunpack.c.2.s8 %v425
      %v435 = vunpack.c.3.s8 %v425
      %v436 = vunpack.c.0.s8 %v426
      %v437 = vunpack.c.1.s8 %v426
      %v438 = vunpack.c.2.s8 %v426
      %v439 = vunpack.c.3.s8 %v426
      %v440 = vunpack.c.0.s8 %v427
      %v441 = vunpack.c.1.s8 %v427
      %v442 = vunpack.c.2.s8 %v427
      %v443 = vunpack.c.3.s8 %v427
      %v444 = vcvt.s32.f32 %v428
      %v445 = vcvt.s32.f32 %v429
      %v446 = vcvt.s32.f32 %v430
      %v447 = vcvt.s32.f32 %v431
      %v448 = vcvt.s32.f32 %v432
      %v449 = vcvt.s32.f32 %v433
      %v450 = vcvt.s32.f32 %v434
      %v451 = vcvt.s32.f32 %v435
      %v452 = vcvt.s32.f32 %v436
      %v453 = vcvt.s32.f32 %v437
      %v454 = vcvt.s32.f32 %v438
      %v455 = vcvt.s32.f32 %v439
      %v456 = vcvt.s32.f32 %v440
      %v457 = vcvt.s32.f32 %v441
      %v458 = vcvt.s32.f32 %v442
      %v459 = vcvt.s32.f32 %v443
      %v460 = vld [vmem:[%s399] sm:$0xff]
      %v461 = vld [vmem:[%s399 + $0x8] sm:$0xff]
      %v462 = vld [vmem:[%s399 + $0x10] sm:$0xff]
      %v463 = vld [vmem:[%s399 + $0x18] sm:$0xff]
      %v464 = vld [vmem:[%s399 + $0x20] sm:$0xff]
      %v465 = vld [vmem:[%s399 + $0x28] sm:$0xff]
      %v466 = vld [vmem:[%s399 + $0x30] sm:$0xff]
      %v467 = vld [vmem:[%s399 + $0x38] sm:$0xff]
      %v468 = vld [vmem:[%s399 + $0x40] sm:$0xff]
      %v469 = vld [vmem:[%s399 + $0x48] sm:$0xff]
      %v470 = vld [vmem:[%s399 + $0x50] sm:$0xff]
      %v471 = vld [vmem:[%s399 + $0x58] sm:$0xff]
      %v472 = vld [vmem:[%s399 + $0x60] sm:$0xff]
      %v473 = vld [vmem:[%s399 + $0x68] sm:$0xff]
      %v474 = vld [vmem:[%s399 + $0x70] sm:$0xff]
      %v475 = vld [vmem:[%s399 + $0x78] sm:$0xff]
      %v476 = vmul.f32 %v408, %v444
      %v477 = vmul.f32 %v409, %v445
      %v478 = vmul.f32 %v410, %v446
      %v479 = vmul.f32 %v411, %v447
      %v480 = vmul.f32 %v412, %v448
      %v481 = vmul.f32 %v413, %v449
      %v482 = vmul.f32 %v414, %v450
      %v483 = vmul.f32 %v415, %v451
      %v484 = vmul.f32 %v416, %v452
      %v485 = vmul.f32 %v417, %v453
      %v486 = vmul.f32 %v418, %v454
      %v487 = vmul.f32 %v419, %v455
      %v488 = vmul.f32 %v420, %v456
      %v489 = vmul.f32 %v421, %v457
      %v490 = vmul.f32 %v422, %v458
      %v491 = vmul.f32 %v423, %v459
      %v492 = vpack.c.bf16 %v477, %v476
      %v493 = vpack.c.bf16 %v479, %v478
      %v494 = vpack.c.bf16 %v481, %v480
      %v495 = vpack.c.bf16 %v483, %v482
      %v496 = vpack.c.bf16 %v485, %v484
      %v497 = vpack.c.bf16 %v487, %v486
      %v498 = vpack.c.bf16 %v489, %v488
      %v499 = vpack.c.bf16 %v491, %v490
      %v500 = vunpack.c.l.s8.bf16 %v424
      %v501 = vunpack.c.h.s8.bf16 %v424
      %v502 = vunpack.c.l.s8.bf16 %v425
      %v503 = vunpack.c.h.s8.bf16 %v425
      %v504 = vunpack.c.l.s8.bf16 %v426
      %v505 = vunpack.c.h.s8.bf16 %v426
      %v506 = vunpack.c.l.s8.bf16 %v427
      %v507 = vunpack.c.h.s8.bf16 %v427
      %v508 = vpack.c.bf16 %v461, %v460
      %v509 = vpack.c.bf16 %v463, %v462
      %v510 = vpack.c.bf16 %v465, %v464
      %v511 = vpack.c.bf16 %v467, %v466
      %v512 = vpack.c.bf16 %v469, %v468
      %v513 = vpack.c.bf16 %v471, %v470
      %v514 = vpack.c.bf16 %v473, %v472
      %v515 = vpack.c.bf16 %v475, %v474
      %v516 = vld [vmem:[%s3] sm:$0xff]
      %v517 = vld [vmem:[%s3 + $0x8] sm:$0xff]
      %v518 = vld [vmem:[%s3 + $0x10] sm:$0xff]
      %v519 = vld [vmem:[%s3 + $0x18] sm:$0xff]
      %v520 = vld [vmem:[%s3 + $0x20] sm:$0xff]
      %v521 = vld [vmem:[%s3 + $0x28] sm:$0xff]
      %v522 = vld [vmem:[%s3 + $0x30] sm:$0xff]
      %v523 = vld [vmem:[%s3 + $0x38] sm:$0xff]
      %v524 = vld [vmem:[%s3 + $0x40] sm:$0xff]
      %v525 = vld [vmem:[%s3 + $0x48] sm:$0xff]
      %v526 = vld [vmem:[%s3 + $0x50] sm:$0xff]
      %v527 = vld [vmem:[%s3 + $0x58] sm:$0xff]
      %v528 = vld [vmem:[%s3 + $0x60] sm:$0xff]
      %v529 = vld [vmem:[%s3 + $0x68] sm:$0xff]
      %v530 = vld [vmem:[%s3 + $0x70] sm:$0xff]
      %v531 = vld [vmem:[%s3 + $0x78] sm:$0xff]
      %v532 = vld [vmem:[%s4] sm:$0xff]
      %v533 = vld [vmem:[%s4 + $0x8] sm:$0xff]
      %v534 = vld [vmem:[%s4 + $0x10] sm:$0xff]
      %v535 = vld [vmem:[%s4 + $0x18] sm:$0xff]
      %v536 = vld [vmem:[%s4 + $0x20] sm:$0xff]
      %v537 = vld [vmem:[%s4 + $0x28] sm:$0xff]
      %v538 = vld [vmem:[%s4 + $0x30] sm:$0xff]
      %v539 = vld [vmem:[%s4 + $0x38] sm:$0xff]
      %v540 = vld [vmem:[%s4 + $0x40] sm:$0xff]
      %v541 = vld [vmem:[%s4 + $0x48] sm:$0xff]
      %v542 = vld [vmem:[%s4 + $0x50] sm:$0xff]
      %v543 = vld [vmem:[%s4 + $0x58] sm:$0xff]
      %v544 = vld [vmem:[%s4 + $0x60] sm:$0xff]
      %v545 = vld [vmem:[%s4 + $0x68] sm:$0xff]
      %v546 = vld [vmem:[%s4 + $0x70] sm:$0xff]
      %v547 = vld [vmem:[%s4 + $0x78] sm:$0xff]
      %v564 = vunpack.c.l.b16 %v532
      %v565 = vunpack.c.h.b16 %v532
      %v566 = vunpack.c.l.b16 %v533
      %v567 = vunpack.c.h.b16 %v533
      %v568 = vunpack.c.l.b16 %v534
      %v569 = vunpack.c.h.b16 %v534
      %v570 = vunpack.c.l.b16 %v535
      %v571 = vunpack.c.h.b16 %v535
      %v572 = vunpack.c.l.b16 %v536
      %v573 = vunpack.c.h.b16 %v536
      %v574 = vunpack.c.l.b16 %v537
      %v575 = vunpack.c.h.b16 %v537
      %v576 = vunpack.c.l.b16 %v538
      %v577 = vunpack.c.h.b16 %v538
      %v578 = vunpack.c.l.b16 %v539
      %v579 = vunpack.c.h.b16 %v539
      %v580 = vunpack.c.l.b16 %v540
      %v581 = vunpack.c.h.b16 %v540
      %v582 = vunpack.c.l.b16 %v541
      %v583 = vunpack.c.h.b16 %v541
      %v584 = vunpack.c.l.b16 %v542
      %v585 = vunpack.c.h.b16 %v542
      %v586 = vunpack.c.l.b16 %v543
      %v587 = vunpack.c.h.b16 %v543
      %v588 = vunpack.c.l.b16 %v544
      %v589 = vunpack.c.h.b16 %v544
      %v590 = vunpack.c.l.b16 %v545
      %v591 = vunpack.c.h.b16 %v545
      %v592 = vunpack.c.l.b16 %v546
      %v593 = vunpack.c.h.b16 %v546
      %v594 = vunpack.c.l.b16 %v547
      %v595 = vunpack.c.h.b16 %v547
      %v596 = vpack.c.b16 %v568, %v564
      %v597 = vpack.c.b16 %v569, %v565
      %v598 = vpack.c.b16 %v570, %v566
      %v599 = vpack.c.b16 %v571, %v567
      %v600 = vpack.c.b16 %v576, %v572
      %v601 = vpack.c.b16 %v577, %v573
      %v602 = vpack.c.b16 %v578, %v574
      %v603 = vpack.c.b16 %v579, %v575
      %v604 = vpack.c.b16 %v584, %v580
      %v605 = vpack.c.b16 %v585, %v581
      %v606 = vpack.c.b16 %v586, %v582
      %v607 = vpack.c.b16 %v587, %v583
      %v608 = vpack.c.b16 %v592, %v588
      %v609 = vpack.c.b16 %v593, %v589
      %v610 = vpack.c.b16 %v594, %v590
      %v611 = vpack.c.b16 %v595, %v591
      %vm628 = vcmask 523264
      %v630 = vsel %vm628, %v500, 0
      %v633 = vsel %vm628, %v501, 0
      %v636 = vsel %vm628, %v502, 0
      %v639 = vsel %vm628, %v503, 0
      %v642 = vsel %vm628, %v504, 0
      %v645 = vsel %vm628, %v505, 0
      %v648 = vsel %vm628, %v506, 0
      %v651 = vsel %vm628, %v507, 0
      %653 = vmatprep.subr.bf16.mxu0 %v597
      %654 = vmatpush1.bf16.msra.mxu0 %v596
      %655 = vmatprep.subr.bf16.mxu0 %v601
      %656 = vmatpush1.bf16.msra.mxu0 %v600
      %657 = vmatprep.subr.bf16.mxu0 %v605
      %658 = vmatpush1.bf16.msra.mxu0 %v604
      %659 = vmatprep.subr.bf16.mxu0 %v609
      %660 = vmatpush1.bf16.msra.mxu0 %v608
      %661 = vmatprep.subr.bf16.mxu0 0
      %662 = vmatpush1.bf16.msra.mxu0 0
      %663 = vmatprep.subr.bf16.mxu0 0
      %664 = vmatpush1.bf16.msra.mxu0 0
      %665 = vmatprep.subr.bf16.mxu0 0
      %666 = vmatpush1.bf16.msra.mxu0 0
      %667 = vmatprep.subr.bf16.mxu0 0
      %668 = vmatpush1.bf16.msra.mxu0 0
      %669 = vmatprep.subr.bf16.mxu0 0
      %670 = vmatpush1.bf16.msra.mxu0 0
      %671 = vmatprep.subr.bf16.mxu0 0
      %672 = vmatpush1.bf16.msra.mxu0 0
      %673 = vmatprep.subr.bf16.mxu0 0
      %674 = vmatpush1.bf16.msra.mxu0 0
      %675 = vmatprep.subr.bf16.mxu0 0
      %676 = vmatpush1.bf16.msra.mxu0 0
      %677 = vmatprep.subr.bf16.mxu0 0
      %678 = vmatpush1.bf16.msra.mxu0 0
      %679 = vmatprep.subr.bf16.mxu0 0
      %680 = vmatpush1.bf16.msra.mxu0 0
      %681 = vmatprep.subr.bf16.mxu0 0
      %682 = vmatpush1.bf16.msra.mxu0 0
      %683 = vmatprep.subr.bf16.mxu0 0
      %684 = vmatpush1.bf16.msra.mxu0 0
      %685 = vmatprep.mubr.bf16.mxu0 0
      %686 = vmatmul.mubr.bf16.gmra.mrb[0].mxu0 %v630
      %v687 = vpop.f32.mrb[0].mxu0
      %v688 = vadd.f32 0.0, %v687
      %v689 = vpop.f32.mrb[0].mxu0
      %v690 = vadd.f32 0.0, %v689
      %v691 = vpop.f32.mrb[0].mxu0
      %v692 = vadd.f32 0.0, %v691
      %v693 = vpop.f32.mrb[0].mxu0
      %v694 = vadd.f32 0.0, %v693
      %695 = vmatprep.mubr.bf16.mxu0 0
      %696 = vmatmul.mubr.bf16.gmra.mrb[0].mxu0 %v633
      %v697 = vpop.f32.mrb[0].mxu0
      %v698 = vadd.f32 0.0, %v697
      %v699 = vpop.f32.mrb[0].mxu0
      %v700 = vadd.f32 0.0, %v699
      %v701 = vpop.f32.mrb[0].mxu0
      %v702 = vadd.f32 0.0, %v701
      %v703 = vpop.f32.mrb[0].mxu0
      %v704 = vadd.f32 0.0, %v703
      %705 = vmatprep.mubr.bf16.mxu0 0
      %706 = vmatmul.mubr.bf16.gmra.mrb[0].mxu0 %v636
      %v707 = vpop.f32.mrb[0].mxu0
      %v708 = vadd.f32 0.0, %v707
      %v709 = vpop.f32.mrb[0].mxu0
      %v710 = vadd.f32 0.0, %v709
      %v711 = vpop.f32.mrb[0].mxu0
      %v712 = vadd.f32 0.0, %v711
      %v713 = vpop.f32.mrb[0].mxu0
      %v714 = vadd.f32 0.0, %v713
      %715 = vmatprep.mubr.bf16.mxu0 0
      %716 = vmatmul.mubr.bf16.gmra.mrb[0].mxu0 %v639
      %v717 = vpop.f32.mrb[0].mxu0
      %v718 = vadd.f32 0.0, %v717
      %v719 = vpop.f32.mrb[0].mxu0
      %v720 = vadd.f32 0.0, %v719
      %v721 = vpop.f32.mrb[0].mxu0
      %v722 = vadd.f32 0.0, %v721
      %v723 = vpop.f32.mrb[0].mxu0
      %v724 = vadd.f32 0.0, %v723
      %725 = vmatprep.mubr.bf16.mxu0 0
      %726 = vmatmul.mubr.bf16.gmra.mrb[0].mxu0 %v642
      %v727 = vpop.f32.mrb[0].mxu0
      %v728 = vadd.f32 0.0, %v727
      %v729 = vpop.f32.mrb[0].mxu0
      %v730 = vadd.f32 0.0, %v729
      %v731 = vpop.f32.mrb[0].mxu0
      %v732 = vadd.f32 0.0, %v731
      %v733 = vpop.f32.mrb[0].mxu0
      %v734 = vadd.f32 0.0, %v733
      %735 = vmatprep.mubr.bf16.mxu0 0
      %736 = vmatmul.mubr.bf16.gmra.mrb[0].mxu0 %v645
      %v737 = vpop.f32.mrb[0].mxu0
      %v738 = vadd.f32 0.0, %v737
      %v739 = vpop.f32.mrb[0].mxu0
      %v740 = vadd.f32 0.0, %v739
      %v741 = vpop.f32.mrb[0].mxu0
      %v742 = vadd.f32 0.0, %v741
      %v743 = vpop.f32.mrb[0].mxu0
      %v744 = vadd.f32 0.0, %v743
      %745 = vmatprep.mubr.bf16.mxu0 0
      %746 = vmatmul.mubr.bf16.gmra.mrb[0].mxu0 %v648
      %v747 = vpop.f32.mrb[0].mxu0
      %v748 = vadd.f32 0.0, %v747
      %v749 = vpop.f32.mrb[0].mxu0
      %v750 = vadd.f32 0.0, %v749
      %v751 = vpop.f32.mrb[0].mxu0
      %v752 = vadd.f32 0.0, %v751
      %v753 = vpop.f32.mrb[0].mxu0
      %v754 = vadd.f32 0.0, %v753
      %755 = vmatprep.mubr.bf16.mxu0 0
      %756 = vmatmul.mubr.bf16.gmra.mrb[0].mxu0 %v651
      %v757 = vpop.f32.mrb[0].mxu0
      %v758 = vadd.f32 0.0, %v757
      %v759 = vpop.f32.mrb[0].mxu0
      %v760 = vadd.f32 0.0, %v759
      %v761 = vpop.f32.mrb[0].mxu0
      %v762 = vadd.f32 0.0, %v761
      %v763 = vpop.f32.mrb[0].mxu0
      %v764 = vadd.f32 0.0, %v763
      %765 = vdwg.mxu0
      %766 = vmatprep.subr.bf16.mxu0 %v599
      %767 = vmatpush1.bf16.msra.mxu0 %v598
      %768 = vmatprep.subr.bf16.mxu0 %v603
      %769 = vmatpush1.bf16.msra.mxu0 %v602
      %770 = vmatprep.subr.bf16.mxu0 %v607
      %771 = vmatpush1.bf16.msra.mxu0 %v606
      %772 = vmatprep.subr.bf16.mxu0 %v611
      %773 = vmatpush1.bf16.msra.mxu0 %v610
      %774 = vmatprep.subr.bf16.mxu0 0
      %775 = vmatpush1.bf16.msra.mxu0 0
      %776 = vmatprep.subr.bf16.mxu0 0
      %777 = vmatpush1.bf16.msra.mxu0 0
      %778 = vmatprep.subr.bf16.mxu0 0
      %779 = vmatpush1.bf16.msra.mxu0 0
      %780 = vmatprep.subr.bf16.mxu0 0
      %781 = vmatpush1.bf16.msra.mxu0 0
      %782 = vmatprep.subr.bf16.mxu0 0
      %783 = vmatpush1.bf16.msra.mxu0 0
      %784 = vmatprep.subr.bf16.mxu0 0
      %785 = vmatpush1.bf16.msra.mxu0 0
      %786 = vmatprep.subr.bf16.mxu0 0
      %787 = vmatpush1.bf16.msra.mxu0 0
      %788 = vmatprep.subr.bf16.mxu0 0
      %789 = vmatpush1.bf16.msra.mxu0 0
      %790 = vmatprep.subr.bf16.mxu0 0
      %791 = vmatpush1.bf16.msra.mxu0 0
      %792 = vmatprep.subr.bf16.mxu0 0
      %793 = vmatpush1.bf16.msra.mxu0 0
      %794 = vmatprep.subr.bf16.mxu0 0
      %795 = vmatpush1.bf16.msra.mxu0 0
      %796 = vmatprep.subr.bf16.mxu0 0
      %797 = vmatpush1.bf16.msra.mxu0 0
      %798 = vmatprep.mubr.bf16.mxu0 0
      %799 = vmatmul.mubr.bf16.gmra.mrb[0].mxu0 %v630
      %v800 = vpop.f32.mrb[0].mxu0
      %v801 = vadd.f32 0.0, %v800
      %v802 = vpop.f32.mrb[0].mxu0
      %v803 = vadd.f32 0.0, %v802
      %v804 = vpop.f32.mrb[0].mxu0
      %v805 = vadd.f32 0.0, %v804
      %v806 = vpop.f32.mrb[0].mxu0
      %v807 = vadd.f32 0.0, %v806
      %808 = vmatprep.mubr.bf16.mxu0 0
      %809 = vmatmul.mubr.bf16.gmra.mrb[0].mxu0 %v633
      %v810 = vpop.f32.mrb[0].mxu0
      %v811 = vadd.f32 0.0, %v810
      %v812 = vpop.f32.mrb[0].mxu0
      %v813 = vadd.f32 0.0, %v812
      %v814 = vpop.f32.mrb[0].mxu0
      %v815 = vadd.f32 0.0, %v814
      %v816 = vpop.f32.mrb[0].mxu0
      %v817 = vadd.f32 0.0, %v816
      %818 = vmatprep.mubr.bf16.mxu0 0
      %819 = vmatmul.mubr.bf16.gmra.mrb[0].mxu0 %v636
      %v820 = vpop.f32.mrb[0].mxu0
      %v821 = vadd.f32 0.0, %v820
      %v822 = vpop.f32.mrb[0].mxu0
      %v823 = vadd.f32 0.0, %v822
      %v824 = vpop.f32.mrb[0].mxu0
      %v825 = vadd.f32 0.0, %v824
      %v826 = vpop.f32.mrb[0].mxu0
      %v827 = vadd.f32 0.0, %v826
      %828 = vmatprep.mubr.bf16.mxu0 0
      %829 = vmatmul.mubr.bf16.gmra.mrb[0].mxu0 %v639
      %v830 = vpop.f32.mrb[0].mxu0
      %v831 = vadd.f32 0.0, %v830
      %v832 = vpop.f32.mrb[0].mxu0
      %v833 = vadd.f32 0.0, %v832
      %v834 = vpop.f32.mrb[0].mxu0
      %v835 = vadd.f32 0.0, %v834
      %v836 = vpop.f32.mrb[0].mxu0
      %v837 = vadd.f32 0.0, %v836
      %838 = vmatprep.mubr.bf16.mxu0 0
      %839 = vmatmul.mubr.bf16.gmra.mrb[0].mxu0 %v642
      %v840 = vpop.f32.mrb[0].mxu0
      %v841 = vadd.f32 0.0, %v840
      %v842 = vpop.f32.mrb[0].mxu0
      %v843 = vadd.f32 0.0, %v842
      %v844 = vpop.f32.mrb[0].mxu0
      %v845 = vadd.f32 0.0, %v844
      %v846 = vpop.f32.mrb[0].mxu0
      %v847 = vadd.f32 0.0, %v846
      %848 = vmatprep.mubr.bf16.mxu0 0
      %849 = vmatmul.mubr.bf16.gmra.mrb[0].mxu0 %v645
      %v850 = vpop.f32.mrb[0].mxu0
      %v851 = vadd.f32 0.0, %v850
      %v852 = vpop.f32.mrb[0].mxu0
      %v853 = vadd.f32 0.0, %v852
      %v854 = vpop.f32.mrb[0].mxu0
      %v855 = vadd.f32 0.0, %v854
      %v856 = vpop.f32.mrb[0].mxu0
      %v857 = vadd.f32 0.0, %v856
      %858 = vmatprep.mubr.bf16.mxu0 0
      %859 = vmatmul.mubr.bf16.gmra.mrb[0].mxu0 %v648
      %v860 = vpop.f32.mrb[0].mxu0
      %v861 = vadd.f32 0.0, %v860
      %v862 = vpop.f32.mrb[0].mxu0
      %v863 = vadd.f32 0.0, %v862
      %v864 = vpop.f32.mrb[0].mxu0
      %v865 = vadd.f32 0.0, %v864
      %v866 = vpop.f32.mrb[0].mxu0
      %v867 = vadd.f32 0.0, %v866
      %868 = vmatprep.mubr.bf16.mxu0 0
      %869 = vmatmul.mubr.bf16.gmra.mrb[0].mxu0 %v651
      %v870 = vpop.f32.mrb[0].mxu0
      %v871 = vadd.f32 0.0, %v870
      %v872 = vpop.f32.mrb[0].mxu0
      %v873 = vadd.f32 0.0, %v872
      %v874 = vpop.f32.mrb[0].mxu0
      %v875 = vadd.f32 0.0, %v874
      %v876 = vpop.f32.mrb[0].mxu0
      %v877 = vadd.f32 0.0, %v876
      %878 = vdwg.mxu0
      %v895 = vunpack.c.l.b16 %v516
      %v896 = vunpack.c.h.b16 %v516
      %v897 = vunpack.c.l.b16 %v517
      %v898 = vunpack.c.h.b16 %v517
      %v899 = vunpack.c.l.b16 %v518
      %v900 = vunpack.c.h.b16 %v518
      %v901 = vunpack.c.l.b16 %v519
      %v902 = vunpack.c.h.b16 %v519
      %v903 = vunpack.c.l.b16 %v520
      %v904 = vunpack.c.h.b16 %v520
      %v905 = vunpack.c.l.b16 %v521
      %v906 = vunpack.c.h.b16 %v521
      %v907 = vunpack.c.l.b16 %v522
      %v908 = vunpack.c.h.b16 %v522
      %v909 = vunpack.c.l.b16 %v523
      %v910 = vunpack.c.h.b16 %v523
      %v911 = vunpack.c.l.b16 %v524
      %v912 = vunpack.c.h.b16 %v524
      %v913 = vunpack.c.l.b16 %v525
      %v914 = vunpack.c.h.b16 %v525
      %v915 = vunpack.c.l.b16 %v526
      %v916 = vunpack.c.h.b16 %v526
      %v917 = vunpack.c.l.b16 %v527
      %v918 = vunpack.c.h.b16 %v527
      %v919 = vunpack.c.l.b16 %v528
      %v920 = vunpack.c.h.b16 %v528
      %v921 = vunpack.c.l.b16 %v529
      %v922 = vunpack.c.h.b16 %v529
      %v923 = vunpack.c.l.b16 %v530
      %v924 = vunpack.c.h.b16 %v530
      %v925 = vunpack.c.l.b16 %v531
      %v926 = vunpack.c.h.b16 %v531
      %v927 = vpack.c.b16 %v899, %v895
      %v928 = vpack.c.b16 %v900, %v896
      %v929 = vpack.c.b16 %v901, %v897
      %v930 = vpack.c.b16 %v902, %v898
      %v931 = vpack.c.b16 %v907, %v903
      %v932 = vpack.c.b16 %v908, %v904
      %v933 = vpack.c.b16 %v909, %v905
      %v934 = vpack.c.b16 %v910, %v906
      %v935 = vpack.c.b16 %v915, %v911
      %v936 = vpack.c.b16 %v916, %v912
      %v937 = vpack.c.b16 %v917, %v913
      %v938 = vpack.c.b16 %v918, %v914
      %v939 = vpack.c.b16 %v923, %v919
      %v940 = vpack.c.b16 %v924, %v920
      %v941 = vpack.c.b16 %v925, %v921
      %v942 = vpack.c.b16 %v926, %v922
      %v960 = vsel %vm628, %v492, 0
      %v963 = vsel %vm628, %v493, 0
      %v966 = vsel %vm628, %v494, 0
      %v969 = vsel %vm628, %v495, 0
      %v972 = vsel %vm628, %v496, 0
      %v975 = vsel %vm628, %v497, 0
      %v978 = vsel %vm628, %v498, 0
      %v981 = vsel %vm628, %v499, 0
      %983 = vmatprep.subr.bf16.mxu0 %v928
      %984 = vmatpush1.bf16.msra.mxu0 %v927
      %985 = vmatprep.subr.bf16.mxu0 %v932
      %986 = vmatpush1.bf16.msra.mxu0 %v931
      %987 = vmatprep.subr.bf16.mxu0 %v936
      %988 = vmatpush1.bf16.msra.mxu0 %v935
      %989 = vmatprep.subr.bf16.mxu0 %v940
      %990 = vmatpush1.bf16.msra.mxu0 %v939
      %991 = vmatprep.subr.bf16.mxu0 0
      %992 = vmatpush1.bf16.msra.mxu0 0
      %993 = vmatprep.subr.bf16.mxu0 0
      %994 = vmatpush1.bf16.msra.mxu0 0
      %995 = vmatprep.subr.bf16.mxu0 0
      %996 = vmatpush1.bf16.msra.mxu0 0
      %997 = vmatprep.subr.bf16.mxu0 0
      %998 = vmatpush1.bf16.msra.mxu0 0
      %999 = vmatprep.subr.bf16.mxu0 0
      %1000 = vmatpush1.bf16.msra.mxu0 0
      %1001 = vmatprep.subr.bf16.mxu0 0
      %1002 = vmatpush1.bf16.msra.mxu0 0
      %1003 = vmatprep.subr.bf16.mxu0 0
      %1004 = vmatpush1.bf16.msra.mxu0 0
      %1005 = vmatprep.subr.bf16.mxu0 0
      %1006 = vmatpush1.bf16.msra.mxu0 0
      %1007 = vmatprep.subr.bf16.mxu0 0
      %1008 = vmatpush1.bf16.msra.mxu0 0
      %1009 = vmatprep.subr.bf16.mxu0 0
      %1010 = vmatpush1.bf16.msra.mxu0 0
      %1011 = vmatprep.subr.bf16.mxu0 0
      %1012 = vmatpush1.bf16.msra.mxu0 0
      %1013 = vmatprep.subr.bf16.mxu0 0
      %1014 = vmatpush1.bf16.msra.mxu0 0
      %1015 = vmatprep.mubr.bf16.mxu0 0
      %1016 = vmatmul.mubr.bf16.gmra.mrb[0].mxu0 %v960
      %v1017 = vpop.f32.mrb[0].mxu0
      %v1018 = vadd.f32 %v688, %v1017
      %v1019 = vpop.f32.mrb[0].mxu0
      %v1020 = vadd.f32 %v690, %v1019
      %v1021 = vpop.f32.mrb[0].mxu0
      %v1022 = vadd.f32 %v692, %v1021
      %v1023 = vpop.f32.mrb[0].mxu0
      %v1024 = vadd.f32 %v694, %v1023
      %1025 = vmatprep.mubr.bf16.mxu0 0
      %1026 = vmatmul.mubr.bf16.gmra.mrb[0].mxu0 %v963
      %v1027 = vpop.f32.mrb[0].mxu0
      %v1028 = vadd.f32 %v698, %v1027
      %v1029 = vpop.f32.mrb[0].mxu0
      %v1030 = vadd.f32 %v700, %v1029
      %v1031 = vpop.f32.mrb[0].mxu0
      %v1032 = vadd.f32 %v702, %v1031
      %v1033 = vpop.f32.mrb[0].mxu0
      %v1034 = vadd.f32 %v704, %v1033
      %1035 = vmatprep.mubr.bf16.mxu0 0
      %1036 = vmatmul.mubr.bf16.gmra.mrb[0].mxu0 %v966
      %v1037 = vpop.f32.mrb[0].mxu0
      %v1038 = vadd.f32 %v708, %v1037
      %v1039 = vpop.f32.mrb[0].mxu0
      %v1040 = vadd.f32 %v710, %v1039
      %v1041 = vpop.f32.mrb[0].mxu0
      %v1042 = vadd.f32 %v712, %v1041
      %v1043 = vpop.f32.mrb[0].mxu0
      %v1044 = vadd.f32 %v714, %v1043
      %1045 = vmatprep.mubr.bf16.mxu0 0
      %1046 = vmatmul.mubr.bf16.gmra.mrb[0].mxu0 %v969
      %v1047 = vpop.f32.mrb[0].mxu0
      %v1048 = vadd.f32 %v718, %v1047
      %v1049 = vpop.f32.mrb[0].mxu0
      %v1050 = vadd.f32 %v720, %v1049
      %v1051 = vpop.f32.mrb[0].mxu0
      %v1052 = vadd.f32 %v722, %v1051
      %v1053 = vpop.f32.mrb[0].mxu0
      %v1054 = vadd.f32 %v724, %v1053
      %1055 = vmatprep.mubr.bf16.mxu0 0
      %1056 = vmatmul.mubr.bf16.gmra.mrb[0].mxu0 %v972
      %v1057 = vpop.f32.mrb[0].mxu0
      %v1058 = vadd.f32 %v728, %v1057
      %v1059 = vpop.f32.mrb[0].mxu0
      %v1060 = vadd.f32 %v730, %v1059
      %v1061 = vpop.f32.mrb[0].mxu0
      %v1062 = vadd.f32 %v732, %v1061
      %v1063 = vpop.f32.mrb[0].mxu0
      %v1064 = vadd.f32 %v734, %v1063
      %1065 = vmatprep.mubr.bf16.mxu0 0
      %1066 = vmatmul.mubr.bf16.gmra.mrb[0].mxu0 %v975
      %v1067 = vpop.f32.mrb[0].mxu0
      %v1068 = vadd.f32 %v738, %v1067
      %v1069 = vpop.f32.mrb[0].mxu0
      %v1070 = vadd.f32 %v740, %v1069
      %v1071 = vpop.f32.mrb[0].mxu0
      %v1072 = vadd.f32 %v742, %v1071
      %v1073 = vpop.f32.mrb[0].mxu0
      %v1074 = vadd.f32 %v744, %v1073
      %1075 = vmatprep.mubr.bf16.mxu0 0
      %1076 = vmatmul.mubr.bf16.gmra.mrb[0].mxu0 %v978
      %v1077 = vpop.f32.mrb[0].mxu0
      %v1078 = vadd.f32 %v748, %v1077
      %v1079 = vpop.f32.mrb[0].mxu0
      %v1080 = vadd.f32 %v750, %v1079
      %v1081 = vpop.f32.mrb[0].mxu0
      %v1082 = vadd.f32 %v752, %v1081
      %v1083 = vpop.f32.mrb[0].mxu0
      %v1084 = vadd.f32 %v754, %v1083
      %1085 = vmatprep.mubr.bf16.mxu0 0
      %1086 = vmatmul.mubr.bf16.gmra.mrb[0].mxu0 %v981
      %v1087 = vpop.f32.mrb[0].mxu0
      %v1088 = vadd.f32 %v758, %v1087
      %v1089 = vpop.f32.mrb[0].mxu0
      %v1090 = vadd.f32 %v760, %v1089
      %v1091 = vpop.f32.mrb[0].mxu0
      %v1092 = vadd.f32 %v762, %v1091
      %v1093 = vpop.f32.mrb[0].mxu0
      %v1094 = vadd.f32 %v764, %v1093
      %1095 = vdwg.mxu0
      %1096 = vmatprep.subr.bf16.mxu0 %v930
      %1097 = vmatpush1.bf16.msra.mxu0 %v929
      %1098 = vmatprep.subr.bf16.mxu0 %v934
      %1099 = vmatpush1.bf16.msra.mxu0 %v933
      %1100 = vmatprep.subr.bf16.mxu0 %v938
      %1101 = vmatpush1.bf16.msra.mxu0 %v937
      %1102 = vmatprep.subr.bf16.mxu0 %v942
      %1103 = vmatpush1.bf16.msra.mxu0 %v941
      %1104 = vmatprep.subr.bf16.mxu0 0
      %1105 = vmatpush1.bf16.msra.mxu0 0
      %1106 = vmatprep.subr.bf16.mxu0 0
      %1107 = vmatpush1.bf16.msra.mxu0 0
      %1108 = vmatprep.subr.bf16.mxu0 0
      %1109 = vmatpush1.bf16.msra.mxu0 0
      %1110 = vmatprep.subr.bf16.mxu0 0
      %1111 = vmatpush1.bf16.msra.mxu0 0
      %1112 = vmatprep.subr.bf16.mxu0 0
      %1113 = vmatpush1.bf16.msra.mxu0 0
      %1114 = vmatprep.subr.bf16.mxu0 0
      %1115 = vmatpush1.bf16.msra.mxu0 0
      %1116 = vmatprep.subr.bf16.mxu0 0
      %1117 = vmatpush1.bf16.msra.mxu0 0
      %1118 = vmatprep.subr.bf16.mxu0 0
      %1119 = vmatpush1.bf16.msra.mxu0 0
      %1120 = vmatprep.subr.bf16.mxu0 0
      %1121 = vmatpush1.bf16.msra.mxu0 0
      %1122 = vmatprep.subr.bf16.mxu0 0
      %1123 = vmatpush1.bf16.msra.mxu0 0
      %1124 = vmatprep.subr.bf16.mxu0 0
      %1125 = vmatpush1.bf16.msra.mxu0 0
      %1126 = vmatprep.subr.bf16.mxu0 0
      %1127 = vmatpush1.bf16.msra.mxu0 0
      %1128 = vmatprep.mubr.bf16.mxu0 0
      %1129 = vmatmul.mubr.bf16.gmra.mrb[0].mxu0 %v960
      %v1130 = vpop.f32.mrb[0].mxu0
      %v1131 = vadd.f32 %v801, %v1130
      %v1132 = vpop.f32.mrb[0].mxu0
      %v1133 = vadd.f32 %v803, %v1132
      %v1134 = vpop.f32.mrb[0].mxu0
      %v1135 = vadd.f32 %v805, %v1134
      %v1136 = vpop.f32.mrb[0].mxu0
      %v1137 = vadd.f32 %v807, %v1136
      %1138 = vmatprep.mubr.bf16.mxu0 0
      %1139 = vmatmul.mubr.bf16.gmra.mrb[0].mxu0 %v963
      %v1140 = vpop.f32.mrb[0].mxu0
      %v1141 = vadd.f32 %v811, %v1140
      %v1142 = vpop.f32.mrb[0].mxu0
      %v1143 = vadd.f32 %v813, %v1142
      %v1144 = vpop.f32.mrb[0].mxu0
      %v1145 = vadd.f32 %v815, %v1144
      %v1146 = vpop.f32.mrb[0].mxu0
      %v1147 = vadd.f32 %v817, %v1146
      %1148 = vmatprep.mubr.bf16.mxu0 0
      %1149 = vmatmul.mubr.bf16.gmra.mrb[0].mxu0 %v966
      %v1150 = vpop.f32.mrb[0].mxu0
      %v1151 = vadd.f32 %v821, %v1150
      %v1152 = vpop.f32.mrb[0].mxu0
      %v1153 = vadd.f32 %v823, %v1152
      %v1154 = vpop.f32.mrb[0].mxu0
      %v1155 = vadd.f32 %v825, %v1154
      %v1156 = vpop.f32.mrb[0].mxu0
      %v1157 = vadd.f32 %v827, %v1156
      %1158 = vmatprep.mubr.bf16.mxu0 0
      %1159 = vmatmul.mubr.bf16.gmra.mrb[0].mxu0 %v969
      %v1160 = vpop.f32.mrb[0].mxu0
      %v1161 = vadd.f32 %v831, %v1160
      %v1162 = vpop.f32.mrb[0].mxu0
      %v1163 = vadd.f32 %v833, %v1162
      %v1164 = vpop.f32.mrb[0].mxu0
      %v1165 = vadd.f32 %v835, %v1164
      %v1166 = vpop.f32.mrb[0].mxu0
      %v1167 = vadd.f32 %v837, %v1166
      %1168 = vmatprep.mubr.bf16.mxu0 0
      %1169 = vmatmul.mubr.bf16.gmra.mrb[0].mxu0 %v972
      %v1170 = vpop.f32.mrb[0].mxu0
      %v1171 = vadd.f32 %v841, %v1170
      %v1172 = vpop.f32.mrb[0].mxu0
      %v1173 = vadd.f32 %v843, %v1172
      %v1174 = vpop.f32.mrb[0].mxu0
      %v1175 = vadd.f32 %v845, %v1174
      %v1176 = vpop.f32.mrb[0].mxu0
      %v1177 = vadd.f32 %v847, %v1176
      %1178 = vmatprep.mubr.bf16.mxu0 0
      %1179 = vmatmul.mubr.bf16.gmra.mrb[0].mxu0 %v975
      %v1180 = vpop.f32.mrb[0].mxu0
      %v1181 = vadd.f32 %v851, %v1180
      %v1182 = vpop.f32.mrb[0].mxu0
      %v1183 = vadd.f32 %v853, %v1182
      %v1184 = vpop.f32.mrb[0].mxu0
      %v1185 = vadd.f32 %v855, %v1184
      %v1186 = vpop.f32.mrb[0].mxu0
      %v1187 = vadd.f32 %v857, %v1186
      %1188 = vmatprep.mubr.bf16.mxu0 0
      %1189 = vmatmul.mubr.bf16.gmra.mrb[0].mxu0 %v978
      %v1190 = vpop.f32.mrb[0].mxu0
      %v1191 = vadd.f32 %v861, %v1190
      %v1192 = vpop.f32.mrb[0].mxu0
      %v1193 = vadd.f32 %v863, %v1192
      %v1194 = vpop.f32.mrb[0].mxu0
      %v1195 = vadd.f32 %v865, %v1194
      %v1196 = vpop.f32.mrb[0].mxu0
      %v1197 = vadd.f32 %v867, %v1196
      %1198 = vmatprep.mubr.bf16.mxu0 0
      %1199 = vmatmul.mubr.bf16.gmra.mrb[0].mxu0 %v981
      %v1200 = vpop.f32.mrb[0].mxu0
      %v1201 = vadd.f32 %v871, %v1200
      %v1202 = vpop.f32.mrb[0].mxu0
      %v1203 = vadd.f32 %v873, %v1202
      %v1204 = vpop.f32.mrb[0].mxu0
      %v1205 = vadd.f32 %v875, %v1204
      %v1206 = vpop.f32.mrb[0].mxu0
      %v1207 = vadd.f32 %v877, %v1206
      %1208 = vdwg.mxu0
      %v1209 = vld [vmem:[%s5] sm:$0xff]
      %v1210 = vld [vmem:[%s5 + $0x8] sm:$0xff]
      %v1211 = vld [vmem:[%s5 + $0x10] sm:$0xff]
      %v1212 = vld [vmem:[%s5 + $0x18] sm:$0xff]
      %v1213 = vld [vmem:[%s5 + $0x20] sm:$0xff]
      %v1214 = vld [vmem:[%s5 + $0x28] sm:$0xff]
      %v1215 = vld [vmem:[%s5 + $0x30] sm:$0xff]
      %v1216 = vld [vmem:[%s5 + $0x38] sm:$0xff]
      %v1225 = vunpack.c.l.b16 %v1209
      %v1226 = vunpack.c.h.b16 %v1209
      %v1227 = vunpack.c.l.b16 %v1210
      %v1228 = vunpack.c.h.b16 %v1210
      %v1229 = vunpack.c.l.b16 %v1211
      %v1230 = vunpack.c.h.b16 %v1211
      %v1231 = vunpack.c.l.b16 %v1212
      %v1232 = vunpack.c.h.b16 %v1212
      %v1233 = vunpack.c.l.b16 %v1213
      %v1234 = vunpack.c.h.b16 %v1213
      %v1235 = vunpack.c.l.b16 %v1214
      %v1236 = vunpack.c.h.b16 %v1214
      %v1237 = vunpack.c.l.b16 %v1215
      %v1238 = vunpack.c.h.b16 %v1215
      %v1239 = vunpack.c.l.b16 %v1216
      %v1240 = vunpack.c.h.b16 %v1216
      %v1241 = vpack.c.b16 %v1229, %v1225
      %v1242 = vpack.c.b16 %v1230, %v1226
      %v1243 = vpack.c.b16 %v1231, %v1227
      %v1244 = vpack.c.b16 %v1232, %v1228
      %v1245 = vpack.c.b16 %v1237, %v1233
      %v1246 = vpack.c.b16 %v1238, %v1234
      %v1247 = vpack.c.b16 %v1239, %v1235
      %v1248 = vpack.c.b16 %v1240, %v1236
      %vm1257 = vcmask 261120
      %v1259 = vsel %vm1257, %v508, 0
      %v1262 = vsel %vm1257, %v509, 0
      %v1265 = vsel %vm1257, %v510, 0
      %v1268 = vsel %vm1257, %v511, 0
      %v1271 = vsel %vm1257, %v512, 0
      %v1274 = vsel %vm1257, %v513, 0
      %v1277 = vsel %vm1257, %v514, 0
      %v1280 = vsel %vm1257, %v515, 0
      %1282 = vmatprep.subr.bf16.mxu0 %v1242
      %1283 = vmatpush1.bf16.msra.mxu0 %v1241
      %1284 = vmatprep.subr.bf16.mxu0 %v1246
      %1285 = vmatpush1.bf16.msra.mxu0 %v1245
      %1286 = vmatprep.subr.bf16.mxu0 0
      %1287 = vmatpush1.bf16.msra.mxu0 0
      %1288 = vmatprep.subr.bf16.mxu0 0
      %1289 = vmatpush1.bf16.msra.mxu0 0
      %1290 = vmatprep.subr.bf16.mxu0 0
      %1291 = vmatpush1.bf16.msra.mxu0 0
      %1292 = vmatprep.subr.bf16.mxu0 0
      %1293 = vmatpush1.bf16.msra.mxu0 0
      %1294 = vmatprep.subr.bf16.mxu0 0
      %1295 = vmatpush1.bf16.msra.mxu0 0
      %1296 = vmatprep.subr.bf16.mxu0 0
      %1297 = vmatpush1.bf16.msra.mxu0 0
      %1298 = vmatprep.subr.bf16.mxu0 0
      %1299 = vmatpush1.bf16.msra.mxu0 0
      %1300 = vmatprep.subr.bf16.mxu0 0
      %1301 = vmatpush1.bf16.msra.mxu0 0
      %1302 = vmatprep.subr.bf16.mxu0 0
      %1303 = vmatpush1.bf16.msra.mxu0 0
      %1304 = vmatprep.subr.bf16.mxu0 0
      %1305 = vmatpush1.bf16.msra.mxu0 0
      %1306 = vmatprep.subr.bf16.mxu0 0
      %1307 = vmatpush1.bf16.msra.mxu0 0
      %1308 = vmatprep.subr.bf16.mxu0 0
      %1309 = vmatpush1.bf16.msra.mxu0 0
      %1310 = vmatprep.subr.bf16.mxu0 0
      %1311 = vmatpush1.bf16.msra.mxu0 0
      %1312 = vmatprep.subr.bf16.mxu0 0
      %1313 = vmatpush1.bf16.msra.mxu0 0
      %1314 = vmatprep.mubr.bf16.mxu0 0
      %1315 = vmatmul.mubr.bf16.gmra.mrb[0].mxu0 %v1259
      %v1316 = vpop.f32.mrb[0].mxu0
      %v1317 = vadd.f32 0.0, %v1316
      %v1318 = vpop.f32.mrb[0].mxu0
      %v1319 = vadd.f32 0.0, %v1318
      %v1320 = vpop.f32.mrb[0].mxu0
      %v1321 = vadd.f32 0.0, %v1320
      %v1322 = vpop.f32.mrb[0].mxu0
      %v1323 = vadd.f32 0.0, %v1322
      %1324 = vmatprep.mubr.bf16.mxu0 0
      %1325 = vmatmul.mubr.bf16.gmra.mrb[0].mxu0 %v1262
      %v1326 = vpop.f32.mrb[0].mxu0
      %v1327 = vadd.f32 0.0, %v1326
      %v1328 = vpop.f32.mrb[0].mxu0
      %v1329 = vadd.f32 0.0, %v1328
      %v1330 = vpop.f32.mrb[0].mxu0
      %v1331 = vadd.f32 0.0, %v1330
      %v1332 = vpop.f32.mrb[0].mxu0
      %v1333 = vadd.f32 0.0, %v1332
      %1334 = vmatprep.mubr.bf16.mxu0 0
      %1335 = vmatmul.mubr.bf16.gmra.mrb[0].mxu0 %v1265
      %v1336 = vpop.f32.mrb[0].mxu0
      %v1337 = vadd.f32 0.0, %v1336
      %v1338 = vpop.f32.mrb[0].mxu0
      %v1339 = vadd.f32 0.0, %v1338
      %v1340 = vpop.f32.mrb[0].mxu0
      %v1341 = vadd.f32 0.0, %v1340
      %v1342 = vpop.f32.mrb[0].mxu0
      %v1343 = vadd.f32 0.0, %v1342
      %1344 = vmatprep.mubr.bf16.mxu0 0
      %1345 = vmatmul.mubr.bf16.gmra.mrb[0].mxu0 %v1268
      %v1346 = vpop.f32.mrb[0].mxu0
      %v1347 = vadd.f32 0.0, %v1346
      %v1348 = vpop.f32.mrb[0].mxu0
      %v1349 = vadd.f32 0.0, %v1348
      %v1350 = vpop.f32.mrb[0].mxu0
      %v1351 = vadd.f32 0.0, %v1350
      %v1352 = vpop.f32.mrb[0].mxu0
      %v1353 = vadd.f32 0.0, %v1352
      %1354 = vmatprep.mubr.bf16.mxu0 0
      %1355 = vmatmul.mubr.bf16.gmra.mrb[0].mxu0 %v1271
      %v1356 = vpop.f32.mrb[0].mxu0
      %v1357 = vadd.f32 0.0, %v1356
      %v1358 = vpop.f32.mrb[0].mxu0
      %v1359 = vadd.f32 0.0, %v1358
      %v1360 = vpop.f32.mrb[0].mxu0
      %v1361 = vadd.f32 0.0, %v1360
      %v1362 = vpop.f32.mrb[0].mxu0
      %v1363 = vadd.f32 0.0, %v1362
      %1364 = vmatprep.mubr.bf16.mxu0 0
      %1365 = vmatmul.mubr.bf16.gmra.mrb[0].mxu0 %v1274
      %v1366 = vpop.f32.mrb[0].mxu0
      %v1367 = vadd.f32 0.0, %v1366
      %v1368 = vpop.f32.mrb[0].mxu0
      %v1369 = vadd.f32 0.0, %v1368
      %v1370 = vpop.f32.mrb[0].mxu0
      %v1371 = vadd.f32 0.0, %v1370
      %v1372 = vpop.f32.mrb[0].mxu0
      %v1373 = vadd.f32 0.0, %v1372
      %1374 = vmatprep.mubr.bf16.mxu0 0
      %1375 = vmatmul.mubr.bf16.gmra.mrb[0].mxu0 %v1277
      %v1376 = vpop.f32.mrb[0].mxu0
      %v1377 = vadd.f32 0.0, %v1376
      %v1378 = vpop.f32.mrb[0].mxu0
      %v1379 = vadd.f32 0.0, %v1378
      %v1380 = vpop.f32.mrb[0].mxu0
      %v1381 = vadd.f32 0.0, %v1380
      %v1382 = vpop.f32.mrb[0].mxu0
      %v1383 = vadd.f32 0.0, %v1382
      %1384 = vmatprep.mubr.bf16.mxu0 0
      %1385 = vmatmul.mubr.bf16.gmra.mrb[0].mxu0 %v1280
      %v1386 = vpop.f32.mrb[0].mxu0
      %v1387 = vadd.f32 0.0, %v1386
      %v1388 = vpop.f32.mrb[0].mxu0
      %v1389 = vadd.f32 0.0, %v1388
      %v1390 = vpop.f32.mrb[0].mxu0
      %v1391 = vadd.f32 0.0, %v1390
      %v1392 = vpop.f32.mrb[0].mxu0
      %v1393 = vadd.f32 0.0, %v1392
      %1394 = vdwg.mxu0
      %1395 = vmatprep.subr.bf16.mxu0 %v1244
      %1396 = vmatpush1.bf16.msra.mxu0 %v1243
      %1397 = vmatprep.subr.bf16.mxu0 %v1248
      %1398 = vmatpush1.bf16.msra.mxu0 %v1247
      %1399 = vmatprep.subr.bf16.mxu0 0
      %1400 = vmatpush1.bf16.msra.mxu0 0
      %1401 = vmatprep.subr.bf16.mxu0 0
      %1402 = vmatpush1.bf16.msra.mxu0 0
      %1403 = vmatprep.subr.bf16.mxu0 0
      %1404 = vmatpush1.bf16.msra.mxu0 0
      %1405 = vmatprep.subr.bf16.mxu0 0
      %1406 = vmatpush1.bf16.msra.mxu0 0
      %1407 = vmatprep.subr.bf16.mxu0 0
      %1408 = vmatpush1.bf16.msra.mxu0 0
      %1409 = vmatprep.subr.bf16.mxu0 0
      %1410 = vmatpush1.bf16.msra.mxu0 0
      %1411 = vmatprep.subr.bf16.mxu0 0
      %1412 = vmatpush1.bf16.msra.mxu0 0
      %1413 = vmatprep.subr.bf16.mxu0 0
      %1414 = vmatpush1.bf16.msra.mxu0 0
      %1415 = vmatprep.subr.bf16.mxu0 0
      %1416 = vmatpush1.bf16.msra.mxu0 0
      %1417 = vmatprep.subr.bf16.mxu0 0
      %1418 = vmatpush1.bf16.msra.mxu0 0
      %1419 = vmatprep.subr.bf16.mxu0 0
      %1420 = vmatpush1.bf16.msra.mxu0 0
      %1421 = vmatprep.subr.bf16.mxu0 0
      %1422 = vmatpush1.bf16.msra.mxu0 0
      %1423 = vmatprep.subr.bf16.mxu0 0
      %1424 = vmatpush1.bf16.msra.mxu0 0
      %1425 = vmatprep.subr.bf16.mxu0 0
      %1426 = vmatpush1.bf16.msra.mxu0 0
      %1427 = vmatprep.mubr.bf16.mxu0 0
      %1428 = vmatmul.mubr.bf16.gmra.mrb[0].mxu0 %v1259
      %v1429 = vpop.f32.mrb[0].mxu0
      %v1430 = vadd.f32 0.0, %v1429
      %v1431 = vpop.f32.mrb[0].mxu0
      %v1432 = vadd.f32 0.0, %v1431
      %v1433 = vpop.f32.mrb[0].mxu0
      %v1434 = vadd.f32 0.0, %v1433
      %v1435 = vpop.f32.mrb[0].mxu0
      %v1436 = vadd.f32 0.0, %v1435
      %1437 = vmatprep.mubr.bf16.mxu0 0
      %1438 = vmatmul.mubr.bf16.gmra.mrb[0].mxu0 %v1262
      %v1439 = vpop.f32.mrb[0].mxu0
      %v1440 = vadd.f32 0.0, %v1439
      %v1441 = vpop.f32.mrb[0].mxu0
      %v1442 = vadd.f32 0.0, %v1441
      %v1443 = vpop.f32.mrb[0].mxu0
      %v1444 = vadd.f32 0.0, %v1443
      %v1445 = vpop.f32.mrb[0].mxu0
      %v1446 = vadd.f32 0.0, %v1445
      %1447 = vmatprep.mubr.bf16.mxu0 0
      %1448 = vmatmul.mubr.bf16.gmra.mrb[0].mxu0 %v1265
      %v1449 = vpop.f32.mrb[0].mxu0
      %v1450 = vadd.f32 0.0, %v1449
      %v1451 = vpop.f32.mrb[0].mxu0
      %v1452 = vadd.f32 0.0, %v1451
      %v1453 = vpop.f32.mrb[0].mxu0
      %v1454 = vadd.f32 0.0, %v1453
      %v1455 = vpop.f32.mrb[0].mxu0
      %v1456 = vadd.f32 0.0, %v1455
      %1457 = vmatprep.mubr.bf16.mxu0 0
      %1458 = vmatmul.mubr.bf16.gmra.mrb[0].mxu0 %v1268
      %v1459 = vpop.f32.mrb[0].mxu0
      %v1460 = vadd.f32 0.0, %v1459
      %v1461 = vpop.f32.mrb[0].mxu0
      %v1462 = vadd.f32 0.0, %v1461
      %v1463 = vpop.f32.mrb[0].mxu0
      %v1464 = vadd.f32 0.0, %v1463
      %v1465 = vpop.f32.mrb[0].mxu0
      %v1466 = vadd.f32 0.0, %v1465
      %1467 = vmatprep.mubr.bf16.mxu0 0
      %1468 = vmatmul.mubr.bf16.gmra.mrb[0].mxu0 %v1271
      %v1469 = vpop.f32.mrb[0].mxu0
      %v1470 = vadd.f32 0.0, %v1469
      %v1471 = vpop.f32.mrb[0].mxu0
      %v1472 = vadd.f32 0.0, %v1471
      %v1473 = vpop.f32.mrb[0].mxu0
      %v1474 = vadd.f32 0.0, %v1473
      %v1475 = vpop.f32.mrb[0].mxu0
      %v1476 = vadd.f32 0.0, %v1475
      %1477 = vmatprep.mubr.bf16.mxu0 0
      %1478 = vmatmul.mubr.bf16.gmra.mrb[0].mxu0 %v1274
      %v1479 = vpop.f32.mrb[0].mxu0
      %v1480 = vadd.f32 0.0, %v1479
      %v1481 = vpop.f32.mrb[0].mxu0
      %v1482 = vadd.f32 0.0, %v1481
      %v1483 = vpop.f32.mrb[0].mxu0
      %v1484 = vadd.f32 0.0, %v1483
      %v1485 = vpop.f32.mrb[0].mxu0
      %v1486 = vadd.f32 0.0, %v1485
      %1487 = vmatprep.mubr.bf16.mxu0 0
      %1488 = vmatmul.mubr.bf16.gmra.mrb[0].mxu0 %v1277
      %v1489 = vpop.f32.mrb[0].mxu0
      %v1490 = vadd.f32 0.0, %v1489
      %v1491 = vpop.f32.mrb[0].mxu0
      %v1492 = vadd.f32 0.0, %v1491
      %v1493 = vpop.f32.mrb[0].mxu0
      %v1494 = vadd.f32 0.0, %v1493
      %v1495 = vpop.f32.mrb[0].mxu0
      %v1496 = vadd.f32 0.0, %v1495
      %1497 = vmatprep.mubr.bf16.mxu0 0
      %1498 = vmatmul.mubr.bf16.gmra.mrb[0].mxu0 %v1280
      %v1499 = vpop.f32.mrb[0].mxu0
      %v1500 = vadd.f32 0.0, %v1499
      %v1501 = vpop.f32.mrb[0].mxu0
      %v1502 = vadd.f32 0.0, %v1501
      %v1503 = vpop.f32.mrb[0].mxu0
      %v1504 = vadd.f32 0.0, %v1503
      %v1505 = vpop.f32.mrb[0].mxu0
      %v1506 = vadd.f32 0.0, %v1505
      %1507 = vdwg.mxu0
      %v1508 = vadd.f32 %v1018, %v1317
      %v1509 = vadd.f32 %v1020, %v1319
      %v1510 = vadd.f32 %v1131, %v1430
      %v1511 = vadd.f32 %v1133, %v1432
      %v1512 = vadd.f32 %v1022, %v1321
      %v1513 = vadd.f32 %v1024, %v1323
      %v1514 = vadd.f32 %v1135, %v1434
      %v1515 = vadd.f32 %v1137, %v1436
      %v1516 = vadd.f32 %v1028, %v1327
      %v1517 = vadd.f32 %v1030, %v1329
      %v1518 = vadd.f32 %v1141, %v1440
      %v1519 = vadd.f32 %v1143, %v1442
      %v1520 = vadd.f32 %v1032, %v1331
      %v1521 = vadd.f32 %v1034, %v1333
      %v1522 = vadd.f32 %v1145, %v1444
      %v1523 = vadd.f32 %v1147, %v1446
      %v1524 = vadd.f32 %v1038, %v1337
      %v1525 = vadd.f32 %v1040, %v1339
      %v1526 = vadd.f32 %v1151, %v1450
      %v1527 = vadd.f32 %v1153, %v1452
      %v1528 = vadd.f32 %v1042, %v1341
      %v1529 = vadd.f32 %v1044, %v1343
      %v1530 = vadd.f32 %v1155, %v1454
      %v1531 = vadd.f32 %v1157, %v1456
      %v1532 = vadd.f32 %v1048, %v1347
      %v1533 = vadd.f32 %v1050, %v1349
      %v1534 = vadd.f32 %v1161, %v1460
      %v1535 = vadd.f32 %v1163, %v1462
      %v1536 = vadd.f32 %v1052, %v1351
      %v1537 = vadd.f32 %v1054, %v1353
      %v1538 = vadd.f32 %v1165, %v1464
      %v1539 = vadd.f32 %v1167, %v1466
      %v1540 = vadd.f32 %v1058, %v1357
      %v1541 = vadd.f32 %v1060, %v1359
      %v1542 = vadd.f32 %v1171, %v1470
      %v1543 = vadd.f32 %v1173, %v1472
      %v1544 = vadd.f32 %v1062, %v1361
      %v1545 = vadd.f32 %v1064, %v1363
      %v1546 = vadd.f32 %v1175, %v1474
      %v1547 = vadd.f32 %v1177, %v1476
      %v1548 = vadd.f32 %v1068, %v1367
      %v1549 = vadd.f32 %v1070, %v1369
      %v1550 = vadd.f32 %v1181, %v1480
      %v1551 = vadd.f32 %v1183, %v1482
      %v1552 = vadd.f32 %v1072, %v1371
      %v1553 = vadd.f32 %v1074, %v1373
      %v1554 = vadd.f32 %v1185, %v1484
      %v1555 = vadd.f32 %v1187, %v1486
      %v1556 = vadd.f32 %v1078, %v1377
      %v1557 = vadd.f32 %v1080, %v1379
      %v1558 = vadd.f32 %v1191, %v1490
      %v1559 = vadd.f32 %v1193, %v1492
      %v1560 = vadd.f32 %v1082, %v1381
      %v1561 = vadd.f32 %v1084, %v1383
      %v1562 = vadd.f32 %v1195, %v1494
      %v1563 = vadd.f32 %v1197, %v1496
      %v1564 = vadd.f32 %v1088, %v1387
      %v1565 = vadd.f32 %v1090, %v1389
      %v1566 = vadd.f32 %v1201, %v1500
      %v1567 = vadd.f32 %v1203, %v1502
      %v1568 = vadd.f32 %v1092, %v1391
      %v1569 = vadd.f32 %v1094, %v1393
      %v1570 = vadd.f32 %v1205, %v1504
      %v1571 = vadd.f32 %v1207, %v1506
      %v1572 = vld [vmem:[%s6] sm:$0xf]
      %v1574 = vlaneseq
      %v1575 = vshrl.u32 %v1574, 7
      %v1576 = vsub.s32 0, %v1575
      %v1577 = vrot.slane %v1572, %v1576
      %v1578 = vlaneseq
      %v1579 = vshrl.u32 %v1578, 7
      %v1580 = vsub.s32 1, %v1579
      %v1581 = vrot.slane %v1572, %v1580
      %v1582 = vlaneseq
      %v1583 = vshrl.u32 %v1582, 7
      %v1584 = vsub.s32 2, %v1583
      %v1585 = vrot.slane %v1572, %v1584
      %v1586 = vlaneseq
      %v1587 = vshrl.u32 %v1586, 7
      %v1588 = vsub.s32 3, %v1587
      %v1589 = vrot.slane %v1572, %v1588
      %v1594 = vadd.f32 %v1508, %v1577
      %v1595 = vadd.f32 %v1509, %v1581
      %v1596 = vadd.f32 %v1510, %v1585
      %v1597 = vadd.f32 %v1511, %v1589
      %v1598 = vadd.f32 %v1512, %v1577
      %v1599 = vadd.f32 %v1513, %v1581
      %v1600 = vadd.f32 %v1514, %v1585
      %v1601 = vadd.f32 %v1515, %v1589
      %v1602 = vadd.f32 %v1516, %v1577
      %v1603 = vadd.f32 %v1517, %v1581
      %v1604 = vadd.f32 %v1518, %v1585
      %v1605 = vadd.f32 %v1519, %v1589
      %v1606 = vadd.f32 %v1520, %v1577
      %v1607 = vadd.f32 %v1521, %v1581
      %v1608 = vadd.f32 %v1522, %v1585
      %v1609 = vadd.f32 %v1523, %v1589
      %v1610 = vadd.f32 %v1524, %v1577
      %v1611 = vadd.f32 %v1525, %v1581
      %v1612 = vadd.f32 %v1526, %v1585
      %v1613 = vadd.f32 %v1527, %v1589
      %v1614 = vadd.f32 %v1528, %v1577
      %v1615 = vadd.f32 %v1529, %v1581
      %v1616 = vadd.f32 %v1530, %v1585
      %v1617 = vadd.f32 %v1531, %v1589
      %v1618 = vadd.f32 %v1532, %v1577
      %v1619 = vadd.f32 %v1533, %v1581
      %v1620 = vadd.f32 %v1534, %v1585
      %v1621 = vadd.f32 %v1535, %v1589
      %v1622 = vadd.f32 %v1536, %v1577
      %v1623 = vadd.f32 %v1537, %v1581
      %v1624 = vadd.f32 %v1538, %v1585
      %v1625 = vadd.f32 %v1539, %v1589
      %v1626 = vadd.f32 %v1540, %v1577
      %v1627 = vadd.f32 %v1541, %v1581
      %v1628 = vadd.f32 %v1542, %v1585
      %v1629 = vadd.f32 %v1543, %v1589
      %v1630 = vadd.f32 %v1544, %v1577
      %v1631 = vadd.f32 %v1545, %v1581
      %v1632 = vadd.f32 %v1546, %v1585
      %v1633 = vadd.f32 %v1547, %v1589
      %v1634 = vadd.f32 %v1548, %v1577
      %v1635 = vadd.f32 %v1549, %v1581
      %v1636 = vadd.f32 %v1550, %v1585
      %v1637 = vadd.f32 %v1551, %v1589
      %v1638 = vadd.f32 %v1552, %v1577
      %v1639 = vadd.f32 %v1553, %v1581
      %v1640 = vadd.f32 %v1554, %v1585
      %v1641 = vadd.f32 %v1555, %v1589
      %v1642 = vadd.f32 %v1556, %v1577
      %v1643 = vadd.f32 %v1557, %v1581
      %v1644 = vadd.f32 %v1558, %v1585
      %v1645 = vadd.f32 %v1559, %v1589
      %v1646 = vadd.f32 %v1560, %v1577
      %v1647 = vadd.f32 %v1561, %v1581
      %v1648 = vadd.f32 %v1562, %v1585
      %v1649 = vadd.f32 %v1563, %v1589
      %v1650 = vadd.f32 %v1564, %v1577
      %v1651 = vadd.f32 %v1565, %v1581
      %v1652 = vadd.f32 %v1566, %v1585
      %v1653 = vadd.f32 %v1567, %v1589
      %v1654 = vadd.f32 %v1568, %v1577
      %v1655 = vadd.f32 %v1569, %v1581
      %v1656 = vadd.f32 %v1570, %v1585
      %v1657 = vadd.f32 %v1571, %v1589
      %v1658 = vmax.f32 %v1594, 0.0
      %v1659 = vmax.f32 %v1595, 0.0
      %v1660 = vmax.f32 %v1596, 0.0
      %v1661 = vmax.f32 %v1597, 0.0
      %v1662 = vmax.f32 %v1598, 0.0
      %v1663 = vmax.f32 %v1599, 0.0
      %v1664 = vmax.f32 %v1600, 0.0
      %v1665 = vmax.f32 %v1601, 0.0
      %v1666 = vmax.f32 %v1602, 0.0
      %v1667 = vmax.f32 %v1603, 0.0
      %v1668 = vmax.f32 %v1604, 0.0
      %v1669 = vmax.f32 %v1605, 0.0
      %v1670 = vmax.f32 %v1606, 0.0
      %v1671 = vmax.f32 %v1607, 0.0
      %v1672 = vmax.f32 %v1608, 0.0
      %v1673 = vmax.f32 %v1609, 0.0
      %v1674 = vmax.f32 %v1610, 0.0
      %v1675 = vmax.f32 %v1611, 0.0
      %v1676 = vmax.f32 %v1612, 0.0
      %v1677 = vmax.f32 %v1613, 0.0
      %v1678 = vmax.f32 %v1614, 0.0
      %v1679 = vmax.f32 %v1615, 0.0
      %v1680 = vmax.f32 %v1616, 0.0
      %v1681 = vmax.f32 %v1617, 0.0
      %v1682 = vmax.f32 %v1618, 0.0
      %v1683 = vmax.f32 %v1619, 0.0
      %v1684 = vmax.f32 %v1620, 0.0
      %v1685 = vmax.f32 %v1621, 0.0
      %v1686 = vmax.f32 %v1622, 0.0
      %v1687 = vmax.f32 %v1623, 0.0
      %v1688 = vmax.f32 %v1624, 0.0
      %v1689 = vmax.f32 %v1625, 0.0
      %v1690 = vmax.f32 %v1626, 0.0
      %v1691 = vmax.f32 %v1627, 0.0
      %v1692 = vmax.f32 %v1628, 0.0
      %v1693 = vmax.f32 %v1629, 0.0
      %v1694 = vmax.f32 %v1630, 0.0
      %v1695 = vmax.f32 %v1631, 0.0
      %v1696 = vmax.f32 %v1632, 0.0
      %v1697 = vmax.f32 %v1633, 0.0
      %v1698 = vmax.f32 %v1634, 0.0
      %v1699 = vmax.f32 %v1635, 0.0
      %v1700 = vmax.f32 %v1636, 0.0
      %v1701 = vmax.f32 %v1637, 0.0
      %v1702 = vmax.f32 %v1638, 0.0
      %v1703 = vmax.f32 %v1639, 0.0
      %v1704 = vmax.f32 %v1640, 0.0
      %v1705 = vmax.f32 %v1641, 0.0
      %v1706 = vmax.f32 %v1642, 0.0
      %v1707 = vmax.f32 %v1643, 0.0
      %v1708 = vmax.f32 %v1644, 0.0
      %v1709 = vmax.f32 %v1645, 0.0
      %v1710 = vmax.f32 %v1646, 0.0
      %v1711 = vmax.f32 %v1647, 0.0
      %v1712 = vmax.f32 %v1648, 0.0
      %v1713 = vmax.f32 %v1649, 0.0
      %v1714 = vmax.f32 %v1650, 0.0
      %v1715 = vmax.f32 %v1651, 0.0
      %v1716 = vmax.f32 %v1652, 0.0
      %v1717 = vmax.f32 %v1653, 0.0
      %v1718 = vmax.f32 %v1654, 0.0
      %v1719 = vmax.f32 %v1655, 0.0
      %v1720 = vmax.f32 %v1656, 0.0
      %v1721 = vmax.f32 %v1657, 0.0
      %v1722 = vpack.c.bf16 %v1662, %v1658
      %v1723 = vpack.c.bf16 %v1663, %v1659
      %v1724 = vpack.c.bf16 %v1664, %v1660
      %v1725 = vpack.c.bf16 %v1665, %v1661
      %v1726 = vpack.c.bf16 %v1670, %v1666
      %v1727 = vpack.c.bf16 %v1671, %v1667
      %v1728 = vpack.c.bf16 %v1672, %v1668
      %v1729 = vpack.c.bf16 %v1673, %v1669
      %v1730 = vpack.c.bf16 %v1678, %v1674
      %v1731 = vpack.c.bf16 %v1679, %v1675
      %v1732 = vpack.c.bf16 %v1680, %v1676
      %v1733 = vpack.c.bf16 %v1681, %v1677
      %v1734 = vpack.c.bf16 %v1686, %v1682
      %v1735 = vpack.c.bf16 %v1687, %v1683
      %v1736 = vpack.c.bf16 %v1688, %v1684
      %v1737 = vpack.c.bf16 %v1689, %v1685
      %v1738 = vpack.c.bf16 %v1694, %v1690
      %v1739 = vpack.c.bf16 %v1695, %v1691
      %v1740 = vpack.c.bf16 %v1696, %v1692
      %v1741 = vpack.c.bf16 %v1697, %v1693
      %v1742 = vpack.c.bf16 %v1702, %v1698
      %v1743 = vpack.c.bf16 %v1703, %v1699
      %v1744 = vpack.c.bf16 %v1704, %v1700
      %v1745 = vpack.c.bf16 %v1705, %v1701
      %v1746 = vpack.c.bf16 %v1710, %v1706
      %v1747 = vpack.c.bf16 %v1711, %v1707
      %v1748 = vpack.c.bf16 %v1712, %v1708
      %v1749 = vpack.c.bf16 %v1713, %v1709
      %v1750 = vpack.c.bf16 %v1718, %v1714
      %v1751 = vpack.c.bf16 %v1719, %v1715
      %v1752 = vpack.c.bf16 %v1720, %v1716
      %v1753 = vpack.c.bf16 %v1721, %v1717
      %v1754 = vld [vmem:[%s7] sm:$0xf]
      %v1755 = vld [vmem:[%s7 + $0x4] sm:$0xf]
      %v1756 = vld [vmem:[%s7 + $0x8] sm:$0xf]
      %v1757 = vld [vmem:[%s7 + $0xc] sm:$0xf]
      %v1758 = vld [vmem:[%s7 + $0x10] sm:$0xf]
      %v1759 = vld [vmem:[%s7 + $0x14] sm:$0xf]
      %v1760 = vld [vmem:[%s7 + $0x18] sm:$0xf]
      %v1761 = vld [vmem:[%s7 + $0x1c] sm:$0xf]
      %v1762 = vld [vmem:[%s7 + $0x20] sm:$0xf]
      %v1763 = vld [vmem:[%s7 + $0x24] sm:$0xf]
      %v1764 = vld [vmem:[%s7 + $0x28] sm:$0xf]
      %v1765 = vld [vmem:[%s7 + $0x2c] sm:$0xf]
      %v1766 = vld [vmem:[%s7 + $0x30] sm:$0xf]
      %v1767 = vld [vmem:[%s7 + $0x34] sm:$0xf]
      %v1768 = vld [vmem:[%s7 + $0x38] sm:$0xf]
      %v1769 = vld [vmem:[%s7 + $0x3c] sm:$0xf]
      %v1770 = vld [vmem:[%s7 + $0x40] sm:$0xf]
      %v1771 = vld [vmem:[%s7 + $0x44] sm:$0xf]
      %v1772 = vld [vmem:[%s7 + $0x48] sm:$0xf]
      %v1773 = vld [vmem:[%s7 + $0x4c] sm:$0xf]
      %v1774 = vld [vmem:[%s7 + $0x50] sm:$0xf]
      %v1775 = vld [vmem:[%s7 + $0x54] sm:$0xf]
      %v1776 = vld [vmem:[%s7 + $0x58] sm:$0xf]
      %v1777 = vld [vmem:[%s7 + $0x5c] sm:$0xf]
      %v1778 = vld [vmem:[%s7 + $0x60] sm:$0xf]
      %v1779 = vld [vmem:[%s7 + $0x64] sm:$0xf]
      %v1780 = vld [vmem:[%s7 + $0x68] sm:$0xf]
      %v1781 = vld [vmem:[%s7 + $0x6c] sm:$0xf]
      %v1782 = vld [vmem:[%s7 + $0x70] sm:$0xf]
      %v1783 = vld [vmem:[%s7 + $0x74] sm:$0xf]
      %v1784 = vld [vmem:[%s7 + $0x78] sm:$0xf]
      %v1785 = vld [vmem:[%s7 + $0x7c] sm:$0xf]
      %v1786 = vld [vmem:[%s7 + $0x80] sm:$0xf]
      %v1787 = vld [vmem:[%s7 + $0x84] sm:$0xf]
      %v1788 = vld [vmem:[%s7 + $0x88] sm:$0xf]
      %v1789 = vld [vmem:[%s7 + $0x8c] sm:$0xf]
      %v1790 = vld [vmem:[%s7 + $0x90] sm:$0xf]
      %v1791 = vld [vmem:[%s7 + $0x94] sm:$0xf]
      %v1792 = vld [vmem:[%s7 + $0x98] sm:$0xf]
      %v1793 = vld [vmem:[%s7 + $0x9c] sm:$0xf]
      %v1794 = vld [vmem:[%s7 + $0xa0] sm:$0xf]
      %v1795 = vld [vmem:[%s7 + $0xa4] sm:$0xf]
      %v1796 = vld [vmem:[%s7 + $0xa8] sm:$0xf]
      %v1797 = vld [vmem:[%s7 + $0xac] sm:$0xf]
      %v1798 = vld [vmem:[%s7 + $0xb0] sm:$0xf]
      %v1799 = vld [vmem:[%s7 + $0xb4] sm:$0xf]
      %v1800 = vld [vmem:[%s7 + $0xb8] sm:$0xf]
      %v1801 = vld [vmem:[%s7 + $0xbc] sm:$0xf]
      %v1802 = vld [vmem:[%s7 + $0xc0] sm:$0xf]
      %v1803 = vld [vmem:[%s7 + $0xc4] sm:$0xf]
      %v1804 = vld [vmem:[%s7 + $0xc8] sm:$0xf]
      %v1805 = vld [vmem:[%s7 + $0xcc] sm:$0xf]
      %v1806 = vld [vmem:[%s7 + $0xd0] sm:$0xf]
      %v1807 = vld [vmem:[%s7 + $0xd4] sm:$0xf]
      %v1808 = vld [vmem:[%s7 + $0xd8] sm:$0xf]
      %v1809 = vld [vmem:[%s7 + $0xdc] sm:$0xf]
      %v1810 = vld [vmem:[%s7 + $0xe0] sm:$0xf]
      %v1811 = vld [vmem:[%s7 + $0xe4] sm:$0xf]
      %v1812 = vld [vmem:[%s7 + $0xe8] sm:$0xf]
      %v1813 = vld [vmem:[%s7 + $0xec] sm:$0xf]
      %v1814 = vld [vmem:[%s7 + $0xf0] sm:$0xf]
      %v1815 = vld [vmem:[%s7 + $0xf4] sm:$0xf]
      %v1816 = vld [vmem:[%s7 + $0xf8] sm:$0xf]
      %v1817 = vld [vmem:[%s7 + $0xfc] sm:$0xf]
      %v1818 = vld [vmem:[%s8] sm:$0x1]
      %v1820 = vlaneseq
      %v1821 = vshrl.u32 %v1820, 7
      %v1822 = vsub.s32 0, %v1821
      %v1823 = vrot.slane %v1818, %v1822
      %v1889 = vunpack.c.l.b16 %v1754
      %v1890 = vunpack.c.l.b16 %v1755
      %v1891 = vunpack.c.l.b16 %v1756
      %v1892 = vunpack.c.l.b16 %v1757
      %v1893 = vunpack.c.l.b16 %v1758
      %v1894 = vunpack.c.l.b16 %v1759
      %v1895 = vunpack.c.l.b16 %v1760
      %v1896 = vunpack.c.l.b16 %v1761
      %v1897 = vunpack.c.l.b16 %v1762
      %v1898 = vunpack.c.l.b16 %v1763
      %v1899 = vunpack.c.l.b16 %v1764
      %v1900 = vunpack.c.l.b16 %v1765
      %v1901 = vunpack.c.l.b16 %v1766
      %v1902 = vunpack.c.l.b16 %v1767
      %v1903 = vunpack.c.l.b16 %v1768
      %v1904 = vunpack.c.l.b16 %v1769
      %v1905 = vunpack.c.l.b16 %v1770
      %v1906 = vunpack.c.l.b16 %v1771
      %v1907 = vunpack.c.l.b16 %v1772
      %v1908 = vunpack.c.l.b16 %v1773
      %v1909 = vunpack.c.l.b16 %v1774
      %v1910 = vunpack.c.l.b16 %v1775
      %v1911 = vunpack.c.l.b16 %v1776
      %v1912 = vunpack.c.l.b16 %v1777
      %v1913 = vunpack.c.l.b16 %v1778
      %v1914 = vunpack.c.l.b16 %v1779
      %v1915 = vunpack.c.l.b16 %v1780
      %v1916 = vunpack.c.l.b16 %v1781
      %v1917 = vunpack.c.l.b16 %v1782
      %v1918 = vunpack.c.l.b16 %v1783
      %v1919 = vunpack.c.l.b16 %v1784
      %v1920 = vunpack.c.l.b16 %v1785
      %v1921 = vunpack.c.l.b16 %v1786
      %v1922 = vunpack.c.l.b16 %v1787
      %v1923 = vunpack.c.l.b16 %v1788
      %v1924 = vunpack.c.l.b16 %v1789
      %v1925 = vunpack.c.l.b16 %v1790
      %v1926 = vunpack.c.l.b16 %v1791
      %v1927 = vunpack.c.l.b16 %v1792
      %v1928 = vunpack.c.l.b16 %v1793
      %v1929 = vunpack.c.l.b16 %v1794
      %v1930 = vunpack.c.l.b16 %v1795
      %v1931 = vunpack.c.l.b16 %v1796
      %v1932 = vunpack.c.l.b16 %v1797
      %v1933 = vunpack.c.l.b16 %v1798
      %v1934 = vunpack.c.l.b16 %v1799
      %v1935 = vunpack.c.l.b16 %v1800
      %v1936 = vunpack.c.l.b16 %v1801
      %v1937 = vunpack.c.l.b16 %v1802
      %v1938 = vunpack.c.l.b16 %v1803
      %v1939 = vunpack.c.l.b16 %v1804
      %v1940 = vunpack.c.l.b16 %v1805
      %v1941 = vunpack.c.l.b16 %v1806
      %v1942 = vunpack.c.l.b16 %v1807
      %v1943 = vunpack.c.l.b16 %v1808
      %v1944 = vunpack.c.l.b16 %v1809
      %v1945 = vunpack.c.l.b16 %v1810
      %v1946 = vunpack.c.l.b16 %v1811
      %v1947 = vunpack.c.l.b16 %v1812
      %v1948 = vunpack.c.l.b16 %v1813
      %v1949 = vunpack.c.l.b16 %v1814
      %v1950 = vunpack.c.l.b16 %v1815
      %v1951 = vunpack.c.l.b16 %v1816
      %v1952 = vunpack.c.l.b16 %v1817
      %v1953 = vpack.c.b16 %v1890, %v1889
      %v1954 = vpack.c.b16 %v1892, %v1891
      %v1955 = vpack.c.b16 %v1894, %v1893
      %v1956 = vpack.c.b16 %v1896, %v1895
      %v1957 = vpack.c.b16 %v1898, %v1897
      %v1958 = vpack.c.b16 %v1900, %v1899
      %v1959 = vpack.c.b16 %v1902, %v1901
      %v1960 = vpack.c.b16 %v1904, %v1903
      %v1961 = vpack.c.b16 %v1906, %v1905
      %v1962 = vpack.c.b16 %v1908, %v1907
      %v1963 = vpack.c.b16 %v1910, %v1909
      %v1964 = vpack.c.b16 %v1912, %v1911
      %v1965 = vpack.c.b16 %v1914, %v1913
      %v1966 = vpack.c.b16 %v1916, %v1915
      %v1967 = vpack.c.b16 %v1918, %v1917
      %v1968 = vpack.c.b16 %v1920, %v1919
      %v1969 = vpack.c.b16 %v1922, %v1921
      %v1970 = vpack.c.b16 %v1924, %v1923
      %v1971 = vpack.c.b16 %v1926, %v1925
      %v1972 = vpack.c.b16 %v1928, %v1927
      %v1973 = vpack.c.b16 %v1930, %v1929
      %v1974 = vpack.c.b16 %v1932, %v1931
      %v1975 = vpack.c.b16 %v1934, %v1933
      %v1976 = vpack.c.b16 %v1936, %v1935
      %v1977 = vpack.c.b16 %v1938, %v1937
      %v1978 = vpack.c.b16 %v1940, %v1939
      %v1979 = vpack.c.b16 %v1942, %v1941
      %v1980 = vpack.c.b16 %v1944, %v1943
      %v1981 = vpack.c.b16 %v1946, %v1945
      %v1982 = vpack.c.b16 %v1948, %v1947
      %v1983 = vpack.c.b16 %v1950, %v1949
      %v1984 = vpack.c.b16 %v1952, %v1951
      %2017 = vmatprep.subr.bf16.mxu0 0
      %2018 = vmatpush1.bf16.msra.mxu0 %v1953
      %2019 = vmatprep.subr.bf16.mxu0 0
      %2020 = vmatpush1.bf16.msra.mxu0 %v1954
      %2021 = vmatprep.subr.bf16.mxu0 0
      %2022 = vmatpush1.bf16.msra.mxu0 %v1955
      %2023 = vmatprep.subr.bf16.mxu0 0
      %2024 = vmatpush1.bf16.msra.mxu0 %v1956
      %2025 = vmatprep.subr.bf16.mxu0 0
      %2026 = vmatpush1.bf16.msra.mxu0 %v1957
      %2027 = vmatprep.subr.bf16.mxu0 0
      %2028 = vmatpush1.bf16.msra.mxu0 %v1958
      %2029 = vmatprep.subr.bf16.mxu0 0
      %2030 = vmatpush1.bf16.msra.mxu0 %v1959
      %2031 = vmatprep.subr.bf16.mxu0 0
      %2032 = vmatpush1.bf16.msra.mxu0 %v1960
      %2033 = vmatprep.subr.bf16.mxu0 0
      %2034 = vmatpush1.bf16.msra.mxu0 %v1961
      %2035 = vmatprep.subr.bf16.mxu0 0
      %2036 = vmatpush1.bf16.msra.mxu0 %v1962
      %2037 = vmatprep.subr.bf16.mxu0 0
      %2038 = vmatpush1.bf16.msra.mxu0 %v1963
      %2039 = vmatprep.subr.bf16.mxu0 0
      %2040 = vmatpush1.bf16.msra.mxu0 %v1964
      %2041 = vmatprep.subr.bf16.mxu0 0
      %2042 = vmatpush1.bf16.msra.mxu0 %v1965
      %2043 = vmatprep.subr.bf16.mxu0 0
      %2044 = vmatpush1.bf16.msra.mxu0 %v1966
      %2045 = vmatprep.subr.bf16.mxu0 0
      %2046 = vmatpush1.bf16.msra.mxu0 %v1967
      %2047 = vmatprep.subr.bf16.mxu0 0
      %2048 = vmatpush1.bf16.msra.mxu0 %v1968
      %2049 = vmatprep.mubr.bf16.mxu0 %v1723
      %2050 = vmatmul.mubr.bf16.gmra.mrb[0].mxu0 %v1722
      %v2051 = vpop.f32.mrb[0].mxu0
      %v2052 = vadd.f32 %v1823, %v2051
      %v2053 = vpop.f32.mrb[0].mxu0
      %v2054 = vpop.f32.mrb[0].mxu0
      %v2055 = vadd.f32 %v1823, %v2054
      %v2056 = vpop.f32.mrb[0].mxu0
      %2057 = vmatprep.mubr.bf16.mxu0 %v1727
      %2058 = vmatmul.mubr.bf16.gmra.mrb[0].mxu0 %v1726
      %v2059 = vpop.f32.mrb[0].mxu0
      %v2060 = vadd.f32 %v1823, %v2059
      %v2061 = vpop.f32.mrb[0].mxu0
      %v2062 = vpop.f32.mrb[0].mxu0
      %v2063 = vadd.f32 %v1823, %v2062
      %v2064 = vpop.f32.mrb[0].mxu0
      %2065 = vmatprep.mubr.bf16.mxu0 %v1731
      %2066 = vmatmul.mubr.bf16.gmra.mrb[0].mxu0 %v1730
      %v2067 = vpop.f32.mrb[0].mxu0
      %v2068 = vadd.f32 %v1823, %v2067
      %v2069 = vpop.f32.mrb[0].mxu0
      %v2070 = vpop.f32.mrb[0].mxu0
      %v2071 = vadd.f32 %v1823, %v2070
      %v2072 = vpop.f32.mrb[0].mxu0
      %2073 = vmatprep.mubr.bf16.mxu0 %v1735
      %2074 = vmatmul.mubr.bf16.gmra.mrb[0].mxu0 %v1734
      %v2075 = vpop.f32.mrb[0].mxu0
      %v2076 = vadd.f32 %v1823, %v2075
      %v2077 = vpop.f32.mrb[0].mxu0
      %v2078 = vpop.f32.mrb[0].mxu0
      %v2079 = vadd.f32 %v1823, %v2078
      %v2080 = vpop.f32.mrb[0].mxu0
      %2081 = vmatprep.mubr.bf16.mxu0 %v1739
      %2082 = vmatmul.mubr.bf16.gmra.mrb[0].mxu0 %v1738
      %v2083 = vpop.f32.mrb[0].mxu0
      %v2084 = vadd.f32 %v1823, %v2083
      %v2085 = vpop.f32.mrb[0].mxu0
      %v2086 = vpop.f32.mrb[0].mxu0
      %v2087 = vadd.f32 %v1823, %v2086
      %v2088 = vpop.f32.mrb[0].mxu0
      %2089 = vmatprep.mubr.bf16.mxu0 %v1743
      %2090 = vmatmul.mubr.bf16.gmra.mrb[0].mxu0 %v1742
      %v2091 = vpop.f32.mrb[0].mxu0
      %v2092 = vadd.f32 %v1823, %v2091
      %v2093 = vpop.f32.mrb[0].mxu0
      %v2094 = vpop.f32.mrb[0].mxu0
      %v2095 = vadd.f32 %v1823, %v2094
      %v2096 = vpop.f32.mrb[0].mxu0
      %2097 = vmatprep.mubr.bf16.mxu0 %v1747
      %2098 = vmatmul.mubr.bf16.gmra.mrb[0].mxu0 %v1746
      %v2099 = vpop.f32.mrb[0].mxu0
      %v2100 = vadd.f32 %v1823, %v2099
      %v2101 = vpop.f32.mrb[0].mxu0
      %v2102 = vpop.f32.mrb[0].mxu0
      %v2103 = vadd.f32 %v1823, %v2102
      %v2104 = vpop.f32.mrb[0].mxu0
      %2105 = vmatprep.mubr.bf16.mxu0 %v1751
      %2106 = vmatmul.mubr.bf16.gmra.mrb[0].mxu0 %v1750
      %v2107 = vpop.f32.mrb[0].mxu0
      %v2108 = vadd.f32 %v1823, %v2107
      %v2109 = vpop.f32.mrb[0].mxu0
      %v2110 = vpop.f32.mrb[0].mxu0
      %v2111 = vadd.f32 %v1823, %v2110
      %v2112 = vpop.f32.mrb[0].mxu0
      %2113 = vdwg.mxu0
      %2114 = vmatprep.subr.bf16.mxu0 0
      %2115 = vmatpush1.bf16.msra.mxu0 %v1969
      %2116 = vmatprep.subr.bf16.mxu0 0
      %2117 = vmatpush1.bf16.msra.mxu0 %v1970
      %2118 = vmatprep.subr.bf16.mxu0 0
      %2119 = vmatpush1.bf16.msra.mxu0 %v1971
      %2120 = vmatprep.subr.bf16.mxu0 0
      %2121 = vmatpush1.bf16.msra.mxu0 %v1972
      %2122 = vmatprep.subr.bf16.mxu0 0
      %2123 = vmatpush1.bf16.msra.mxu0 %v1973
      %2124 = vmatprep.subr.bf16.mxu0 0
      %2125 = vmatpush1.bf16.msra.mxu0 %v1974
      %2126 = vmatprep.subr.bf16.mxu0 0
      %2127 = vmatpush1.bf16.msra.mxu0 %v1975
      %2128 = vmatprep.subr.bf16.mxu0 0
      %2129 = vmatpush1.bf16.msra.mxu0 %v1976
      %2130 = vmatprep.subr.bf16.mxu0 0
      %2131 = vmatpush1.bf16.msra.mxu0 %v1977
      %2132 = vmatprep.subr.bf16.mxu0 0
      %2133 = vmatpush1.bf16.msra.mxu0 %v1978
      %2134 = vmatprep.subr.bf16.mxu0 0
      %2135 = vmatpush1.bf16.msra.mxu0 %v1979
      %2136 = vmatprep.subr.bf16.mxu0 0
      %2137 = vmatpush1.bf16.msra.mxu0 %v1980
      %2138 = vmatprep.subr.bf16.mxu0 0
      %2139 = vmatpush1.bf16.msra.mxu0 %v1981
      %2140 = vmatprep.subr.bf16.mxu0 0
      %2141 = vmatpush1.bf16.msra.mxu0 %v1982
      %2142 = vmatprep.subr.bf16.mxu0 0
      %2143 = vmatpush1.bf16.msra.mxu0 %v1983
      %2144 = vmatprep.subr.bf16.mxu0 0
      %2145 = vmatpush1.bf16.msra.mxu0 %v1984
      %2146 = vmatprep.mubr.bf16.mxu0 %v1725
      %2147 = vmatmul.mubr.bf16.gmra.mrb[0].mxu0 %v1724
      %v2148 = vpop.f32.mrb[0].mxu0
      %v2149 = vadd.f32 %v2052, %v2148
      %v2150 = vpop.f32.mrb[0].mxu0
      %v2151 = vpop.f32.mrb[0].mxu0
      %v2152 = vadd.f32 %v2055, %v2151
      %v2153 = vpop.f32.mrb[0].mxu0
      %2154 = vmatprep.mubr.bf16.mxu0 %v1729
      %2155 = vmatmul.mubr.bf16.gmra.mrb[0].mxu0 %v1728
      %v2156 = vpop.f32.mrb[0].mxu0
      %v2157 = vadd.f32 %v2060, %v2156
      %v2158 = vpop.f32.mrb[0].mxu0
      %v2159 = vpop.f32.mrb[0].mxu0
      %v2160 = vadd.f32 %v2063, %v2159
      %v2161 = vpop.f32.mrb[0].mxu0
      %2162 = vmatprep.mubr.bf16.mxu0 %v1733
      %2163 = vmatmul.mubr.bf16.gmra.mrb[0].mxu0 %v1732
      %v2164 = vpop.f32.mrb[0].mxu0
      %v2165 = vadd.f32 %v2068, %v2164
      %v2166 = vpop.f32.mrb[0].mxu0
      %v2167 = vpop.f32.mrb[0].mxu0
      %v2168 = vadd.f32 %v2071, %v2167
      %v2169 = vpop.f32.mrb[0].mxu0
      %2170 = vmatprep.mubr.bf16.mxu0 %v1737
      %2171 = vmatmul.mubr.bf16.gmra.mrb[0].mxu0 %v1736
      %v2172 = vpop.f32.mrb[0].mxu0
      %v2173 = vadd.f32 %v2076, %v2172
      %v2174 = vpop.f32.mrb[0].mxu0
      %v2175 = vpop.f32.mrb[0].mxu0
      %v2176 = vadd.f32 %v2079, %v2175
      %v2177 = vpop.f32.mrb[0].mxu0
      %2178 = vmatprep.mubr.bf16.mxu0 %v1741
      %2179 = vmatmul.mubr.bf16.gmra.mrb[0].mxu0 %v1740
      %v2180 = vpop.f32.mrb[0].mxu0
      %v2181 = vadd.f32 %v2084, %v2180
      %v2182 = vpop.f32.mrb[0].mxu0
      %v2183 = vpop.f32.mrb[0].mxu0
      %v2184 = vadd.f32 %v2087, %v2183
      %v2185 = vpop.f32.mrb[0].mxu0
      %2186 = vmatprep.mubr.bf16.mxu0 %v1745
      %2187 = vmatmul.mubr.bf16.gmra.mrb[0].mxu0 %v1744
      %v2188 = vpop.f32.mrb[0].mxu0
      %v2189 = vadd.f32 %v2092, %v2188
      %v2190 = vpop.f32.mrb[0].mxu0
      %v2191 = vpop.f32.mrb[0].mxu0
      %v2192 = vadd.f32 %v2095, %v2191
      %v2193 = vpop.f32.mrb[0].mxu0
      %2194 = vmatprep.mubr.bf16.mxu0 %v1749
      %2195 = vmatmul.mubr.bf16.gmra.mrb[0].mxu0 %v1748
      %v2196 = vpop.f32.mrb[0].mxu0
      %v2197 = vadd.f32 %v2100, %v2196
      %v2198 = vpop.f32.mrb[0].mxu0
      %v2199 = vpop.f32.mrb[0].mxu0
      %v2200 = vadd.f32 %v2103, %v2199
      %v2201 = vpop.f32.mrb[0].mxu0
      %2202 = vmatprep.mubr.bf16.mxu0 %v1753
      %2203 = vmatmul.mubr.bf16.gmra.mrb[0].mxu0 %v1752
      %v2204 = vpop.f32.mrb[0].mxu0
      %v2205 = vadd.f32 %v2108, %v2204
      %v2206 = vpop.f32.mrb[0].mxu0
      %v2207 = vpop.f32.mrb[0].mxu0
      %v2208 = vadd.f32 %v2111, %v2207
      %v2209 = vpop.f32.mrb[0].mxu0
      %2210 = vdwg.mxu0
      %v2211 = vmul.f32 %v2149, %v2149
      %v2212 = vmul.f32 %v2152, %v2152
      %v2213 = vmul.f32 %v2157, %v2157
      %v2214 = vmul.f32 %v2160, %v2160
      %v2215 = vmul.f32 %v2165, %v2165
      %v2216 = vmul.f32 %v2168, %v2168
      %v2217 = vmul.f32 %v2173, %v2173
      %v2218 = vmul.f32 %v2176, %v2176
      %v2219 = vmul.f32 %v2181, %v2181
      %v2220 = vmul.f32 %v2184, %v2184
      %v2221 = vmul.f32 %v2189, %v2189
      %v2222 = vmul.f32 %v2192, %v2192
      %v2223 = vmul.f32 %v2197, %v2197
      %v2224 = vmul.f32 %v2200, %v2200
      %v2225 = vmul.f32 %v2205, %v2205
      %v2226 = vmul.f32 %v2208, %v2208
      %v2227 = vld [vmem:[%s9] sm:$0xff]
      %v2228 = vld [vmem:[%s9 + $0x8] sm:$0xff]
      %v2229 = vld [vmem:[%s9 + $0x10] sm:$0xff]
      %v2230 = vld [vmem:[%s9 + $0x18] sm:$0xff]
      %v2231 = vld [vmem:[%s9 + $0x20] sm:$0xff]
      %v2232 = vld [vmem:[%s9 + $0x28] sm:$0xff]
      %v2233 = vld [vmem:[%s9 + $0x30] sm:$0xff]
      %v2234 = vld [vmem:[%s9 + $0x38] sm:$0xff]
      %v2235 = vld [vmem:[%s9 + $0x40] sm:$0xff]
      %v2236 = vld [vmem:[%s9 + $0x48] sm:$0xff]
      %v2237 = vld [vmem:[%s9 + $0x50] sm:$0xff]
      %v2238 = vld [vmem:[%s9 + $0x58] sm:$0xff]
      %v2239 = vld [vmem:[%s9 + $0x60] sm:$0xff]
      %v2240 = vld [vmem:[%s9 + $0x68] sm:$0xff]
      %v2241 = vld [vmem:[%s9 + $0x70] sm:$0xff]
      %v2242 = vld [vmem:[%s9 + $0x78] sm:$0xff]
      %2243 = vmatprep.subr.mxu0 0.0
      %2244 = vmatpush1.msra.mxu0 %v2227
      %2245 = vmatprep.subr.mxu0 0.0
      %2246 = vmatpush1.msra.mxu0 %v2228
      %2247 = vmatprep.subr.mxu0 0.0
      %2248 = vmatpush1.msra.mxu0 %v2229
      %2249 = vmatprep.subr.mxu0 0.0
      %2250 = vmatpush1.msra.mxu0 %v2230
      %2251 = vmatprep.subr.mxu0 0.0
      %2252 = vmatpush1.msra.mxu0 %v2231
      %2253 = vmatprep.subr.mxu0 0.0
      %2254 = vmatpush1.msra.mxu0 %v2232
      %2255 = vmatprep.subr.mxu0 0.0
      %2256 = vmatpush1.msra.mxu0 %v2233
      %2257 = vmatprep.subr.mxu0 0.0
      %2258 = vmatpush1.msra.mxu0 %v2234
      %2259 = vmatprep.subr.mxu0 0.0
      %2260 = vmatpush1.msra.mxu0 %v2235
      %2261 = vmatprep.subr.mxu0 0.0
      %2262 = vmatpush1.msra.mxu0 %v2236
      %2263 = vmatprep.subr.mxu0 0.0
      %2264 = vmatpush1.msra.mxu0 %v2237
      %2265 = vmatprep.subr.mxu0 0.0
      %2266 = vmatpush1.msra.mxu0 %v2238
      %2267 = vmatprep.subr.mxu0 0.0
      %2268 = vmatpush1.msra.mxu0 %v2239
      %2269 = vmatprep.subr.mxu0 0.0
      %2270 = vmatpush1.msra.mxu0 %v2240
      %2271 = vmatprep.subr.mxu0 0.0
      %2272 = vmatpush1.msra.mxu0 %v2241
      %2273 = vmatprep.subr.mxu0 0.0
      %2274 = vmatpush1.msra.mxu0 %v2242
      %2275 = vmatprep.subr.mxu0 0.0
      %2276 = vmatpush1.msra.mxu0 0.0
      %2277 = vmatprep.subr.mxu0 0.0
      %2278 = vmatpush1.msra.mxu0 0.0
      %2279 = vmatprep.subr.mxu0 0.0
      %2280 = vmatpush1.msra.mxu0 0.0
      %2281 = vmatprep.subr.mxu0 0.0
      %2282 = vmatpush1.msra.mxu0 0.0
      %2283 = vmatprep.subr.mxu0 0.0
      %2284 = vmatpush1.msra.mxu0 0.0
      %2285 = vmatprep.subr.mxu0 0.0
      %2286 = vmatpush1.msra.mxu0 0.0
      %2287 = vmatprep.subr.mxu0 0.0
      %2288 = vmatpush1.msra.mxu0 0.0
      %2289 = vmatprep.subr.mxu0 0.0
      %2290 = vmatpush1.msra.mxu0 0.0
      %2291 = vmatprep.subr.mxu0 0.0
      %2292 = vmatpush1.msra.mxu0 0.0
      %2293 = vmatprep.subr.mxu0 0.0
      %2294 = vmatpush1.msra.mxu0 0.0
      %2295 = vmatprep.subr.mxu0 0.0
      %2296 = vmatpush1.msra.mxu0 0.0
      %2297 = vmatprep.subr.mxu0 0.0
      %2298 = vmatpush1.msra.mxu0 0.0
      %2299 = vmatprep.subr.mxu0 0.0
      %2300 = vmatpush1.msra.mxu0 0.0
      %2301 = vmatprep.subr.mxu0 0.0
      %2302 = vmatpush1.msra.mxu0 0.0
      %2303 = vmatprep.subr.mxu0 0.0
      %2304 = vmatpush1.msra.mxu0 0.0
      %2305 = vmatprep.subr.mxu0 0.0
      %2306 = vmatpush1.msra.mxu0 0.0
      %2307 = vmatprep.mubr.f32.mxu0 0.0
      %2308 = vmatmul.mubr.f32.gmra.mrb[0].mxu0 %v2211
      %v2309 = vpop.f32.mrb[0].mxu0
      %v2310 = vadd.f32 0.0, %v2309
      %v2311 = vpop.f32.mrb[0].mxu0
      %2312 = vmatprep.mubr.f32.mxu0 0.0
      %2313 = vmatmul.mubr.f32.gmra.mrb[0].mxu0 %v2212
      %v2314 = vpop.f32.mrb[0].mxu0
      %v2315 = vadd.f32 0.0, %v2314
      %v2316 = vpop.f32.mrb[0].mxu0
      %2317 = vmatprep.mubr.f32.mxu0 0.0
      %2318 = vmatmul.mubr.f32.gmra.mrb[0].mxu0 %v2213
      %v2319 = vpop.f32.mrb[0].mxu0
      %v2320 = vadd.f32 0.0, %v2319
      %v2321 = vpop.f32.mrb[0].mxu0
      %2322 = vmatprep.mubr.f32.mxu0 0.0
      %2323 = vmatmul.mubr.f32.gmra.mrb[0].mxu0 %v2214
      %v2324 = vpop.f32.mrb[0].mxu0
      %v2325 = vadd.f32 0.0, %v2324
      %v2326 = vpop.f32.mrb[0].mxu0
      %2327 = vmatprep.mubr.f32.mxu0 0.0
      %2328 = vmatmul.mubr.f32.gmra.mrb[0].mxu0 %v2215
      %v2329 = vpop.f32.mrb[0].mxu0
      %v2330 = vadd.f32 0.0, %v2329
      %v2331 = vpop.f32.mrb[0].mxu0
      %2332 = vmatprep.mubr.f32.mxu0 0.0
      %2333 = vmatmul.mubr.f32.gmra.mrb[0].mxu0 %v2216
      %v2334 = vpop.f32.mrb[0].mxu0
      %v2335 = vadd.f32 0.0, %v2334
      %v2336 = vpop.f32.mrb[0].mxu0
      %2337 = vmatprep.mubr.f32.mxu0 0.0
      %2338 = vmatmul.mubr.f32.gmra.mrb[0].mxu0 %v2217
      %v2339 = vpop.f32.mrb[0].mxu0
      %v2340 = vadd.f32 0.0, %v2339
      %v2341 = vpop.f32.mrb[0].mxu0
      %2342 = vmatprep.mubr.f32.mxu0 0.0
      %2343 = vmatmul.mubr.f32.gmra.mrb[0].mxu0 %v2218
      %v2344 = vpop.f32.mrb[0].mxu0
      %v2345 = vadd.f32 0.0, %v2344
      %v2346 = vpop.f32.mrb[0].mxu0
      %2347 = vmatprep.mubr.f32.mxu0 0.0
      %2348 = vmatmul.mubr.f32.gmra.mrb[0].mxu0 %v2219
      %v2349 = vpop.f32.mrb[0].mxu0
      %v2350 = vadd.f32 0.0, %v2349
      %v2351 = vpop.f32.mrb[0].mxu0
      %2352 = vmatprep.mubr.f32.mxu0 0.0
      %2353 = vmatmul.mubr.f32.gmra.mrb[0].mxu0 %v2220
      %v2354 = vpop.f32.mrb[0].mxu0
      %v2355 = vadd.f32 0.0, %v2354
      %v2356 = vpop.f32.mrb[0].mxu0
      %2357 = vmatprep.mubr.f32.mxu0 0.0
      %2358 = vmatmul.mubr.f32.gmra.mrb[0].mxu0 %v2221
      %v2359 = vpop.f32.mrb[0].mxu0
      %v2360 = vadd.f32 0.0, %v2359
      %v2361 = vpop.f32.mrb[0].mxu0
      %2362 = vmatprep.mubr.f32.mxu0 0.0
      %2363 = vmatmul.mubr.f32.gmra.mrb[0].mxu0 %v2222
      %v2364 = vpop.f32.mrb[0].mxu0
      %v2365 = vadd.f32 0.0, %v2364
      %v2366 = vpop.f32.mrb[0].mxu0
      %2367 = vmatprep.mubr.f32.mxu0 0.0
      %2368 = vmatmul.mubr.f32.gmra.mrb[0].mxu0 %v2223
      %v2369 = vpop.f32.mrb[0].mxu0
      %v2370 = vadd.f32 0.0, %v2369
      %v2371 = vpop.f32.mrb[0].mxu0
      %2372 = vmatprep.mubr.f32.mxu0 0.0
      %2373 = vmatmul.mubr.f32.gmra.mrb[0].mxu0 %v2224
      %v2374 = vpop.f32.mrb[0].mxu0
      %v2375 = vadd.f32 0.0, %v2374
      %v2376 = vpop.f32.mrb[0].mxu0
      %2377 = vmatprep.mubr.f32.mxu0 0.0
      %2378 = vmatmul.mubr.f32.gmra.mrb[0].mxu0 %v2225
      %v2379 = vpop.f32.mrb[0].mxu0
      %v2380 = vadd.f32 0.0, %v2379
      %v2381 = vpop.f32.mrb[0].mxu0
      %2382 = vmatprep.mubr.f32.mxu0 0.0
      %2383 = vmatmul.mubr.f32.gmra.mrb[0].mxu0 %v2226
      %v2384 = vpop.f32.mrb[0].mxu0
      %v2385 = vadd.f32 0.0, %v2384
      %v2386 = vpop.f32.mrb[0].mxu0
      %2387 = vdwg.mxu0
      %v2388 = vlaneseq
      %v2389 = vand.u32 %v2388, 127
      %vm2390 = vcmp.lt.s32.totalorder %v2389, 16
      %v2391 = vsel %vm2390, %v2149, %v2310
      %v2392 = vsel %vm2390, %v2152, %v2315
      %v2393 = vsel %vm2390, %v2157, %v2320
      %v2394 = vsel %vm2390, %v2160, %v2325
      %v2395 = vsel %vm2390, %v2165, %v2330
      %v2396 = vsel %vm2390, %v2168, %v2335
      %v2397 = vsel %vm2390, %v2173, %v2340
      %v2398 = vsel %vm2390, %v2176, %v2345
      %v2399 = vsel %vm2390, %v2181, %v2350
      %v2400 = vsel %vm2390, %v2184, %v2355
      %v2401 = vsel %vm2390, %v2189, %v2360
      %v2402 = vsel %vm2390, %v2192, %v2365
      %v2403 = vsel %vm2390, %v2197, %v2370
      %v2404 = vsel %vm2390, %v2200, %v2375
      %v2405 = vsel %vm2390, %v2205, %v2380
      %v2406 = vsel %vm2390, %v2208, %v2385
      %2407 = vst [vmem:[%s405] sm:$0xff] %v2391
      %2408 = vst [vmem:[%s405 + $0x8] sm:$0xff] %v2392
      %2409 = vst [vmem:[%s405 + $0x10] sm:$0xff] %v2393
      %2410 = vst [vmem:[%s405 + $0x18] sm:$0xff] %v2394
      %2411 = vst [vmem:[%s405 + $0x20] sm:$0xff] %v2395
      %2412 = vst [vmem:[%s405 + $0x28] sm:$0xff] %v2396
      %2413 = vst [vmem:[%s405 + $0x30] sm:$0xff] %v2397
      %2414 = vst [vmem:[%s405 + $0x38] sm:$0xff] %v2398
      %2415 = vst [vmem:[%s405 + $0x40] sm:$0xff] %v2399
      %2416 = vst [vmem:[%s405 + $0x48] sm:$0xff] %v2400
      %2417 = vst [vmem:[%s405 + $0x50] sm:$0xff] %v2401
      %2418 = vst [vmem:[%s405 + $0x58] sm:$0xff] %v2402
      %2419 = vst [vmem:[%s405 + $0x60] sm:$0xff] %v2403
      %2420 = vst [vmem:[%s405 + $0x68] sm:$0xff] %v2404
      %2421 = vst [vmem:[%s405 + $0x70] sm:$0xff] %v2405
      %2422 = vst [vmem:[%s405 + $0x78] sm:$0xff] %v2406
      %s2423 = smul.u32 16, %s21
      %p2424 = scmp.lt.s32.totalorder %s2423, 31
      %s2425 = scalar_select %p2424, %s2423, 31
      %s2426 = smul.addr %s2425, 8
      %s2427 = scalar_lea.vmem %s10, %s2426
      // Predicated region
      $region61: #{ensemble_forward.1} parent=59 // pred_check
        %p2428 = pneg %p264
      $region62: #{ensemble_forward.1} parent=59 // pred_check_branch
        %2430 = sbr.rel (%p2428) target = $region64
      $region63: #{ensemble_forward.1} parent=59 // pred_region
        %s2431 = smul.u32 16, %s21
      $region64: #{ensemble_forward.1} parent=59 // pred_fallthru
        _
    $region60: #{ensemble_forward.1} parent=5 // pred_fallthru
      _
    %p2432 = scmp.le.s32.totalorder 2, %s16
    // Predicated region
    $region65: #{ensemble_forward.1} parent=5 // pred_check
      %p2433 = pneg %p2432
    $region66: #{ensemble_forward.1} parent=5 // pred_check_branch
      %2435 = sbr.rel (%p2433) target = $region68
    $region67: #{ensemble_forward.1} parent=5 // pred_region
      %s2436 = ssub.s32 %s16, 2
      // Predicated region
      $region69: #{ensemble_forward.1} parent=67 // pred_check
        %p2437 = pneg %p270
      $region70: #{ensemble_forward.1} parent=67 // pred_check_branch
        %2439 = sbr.rel (%p2437) target = $region72
      $region71: #{ensemble_forward.1} parent=67 // pred_region
        %s2440 = smul.u32 16, %s22
        %p2441 = scmp.lt.s32.totalorder %s2440, 31
        %s2442 = scalar_select %p2441, %s2440, 31
        %s2443 = smul.addr %s2442, 8
        %s2444 = scalar_lea.vmem %s10, %s2443
      $region72: #{ensemble_forward.1} parent=67 // pred_fallthru
        _
    $region68: #{ensemble_forward.1} parent=5 // pred_fallthru
      _
  $region6: #{ensemble_forward.1} parent=0 // loop_footer
    %s20 = sadd.s32 1, %s16
  $region7: #{ensemble_forward.1} parent=0 // loop_footer_branch
    %15 = sbr.rel target = $region3
  $region8: #{ensemble_forward.1} parent=0 // loop_exit
    _

</llo_original>
